<compile_context>
chip_gen: v6e
topology: v6e:2x2x1
jax: 0.10.0
libtpu: 0.0.40
codegen_flags: <defaults>
</compile_context>

<pallas_src>
import jax
import jax.numpy as jnp
from jax.experimental import pallas as pl
from jax.experimental.pallas import tpu as pltpu


def _round_up(x, m):
    return ((x + m - 1) // m) * m


def _mf_matching_kernel(ui_ref, w_ref, b_ref, o_ref):
    """One batch tile of the fused MF_linear forward (single grid step per tile).

    ui_ref : [2*tm, D]  user rows [0:tm], item rows [tm:2*tm] of this batch tile (MXU dtype)
    w_ref  : [D, N]     shared llama_proj weight, pre-transposed, resident in VMEM
    b_ref  : [1, N]     llama_proj bias (f32)
    o_ref  : [tm, 1]    matching scores (f32)
    """
    tm = o_ref.shape[0]
    # One MXU call projects both the user and the item embeddings of this tile.
    proj = jnp.dot(ui_ref[...], w_ref[...], preferred_element_type=jnp.float32)
    proj = proj + b_ref[...]                 # bias broadcast over rows, f32 on the VPU
    u_p = proj[:tm, :]                       # static, sublane-aligned slices (tm % 8 == 0)
    i_p = proj[tm:, :]
    o_ref[...] = jnp.sum(u_p * i_p, axis=-1, keepdims=True).astype(o_ref.dtype)


def mf_matching(u_emb, i_emb, w_t, b2, *, block_b=256):
    """sum((u_emb @ w_t + b) * (i_emb @ w_t + b), -1) as one fused Pallas call.

    u_emb, i_emb : [B, D] in the MXU compute dtype (bf16 or f32)
    w_t          : [D, N] (bf16 or f32), N a multiple of 128 (zero-padded at init)
    b2           : [1, N] float32 (zero-padded to match)
    returns      : [B] float32
    """
    B, D = u_emb.shape
    Dw, N = w_t.shape
    assert Dw == D and b2.shape == (1, N)
    assert N % 128 == 0, "pad the projection width to a multiple of 128 at init"

    # Batch tiling: sublane-aligned.  Split into >=2 tiles when possible so the "parallel"
    # grid axis can be sharded across both v7x TensorCores.
    tm = min(block_b, _round_up(B, 8))
    if B > 8:
        tm = min(tm, _round_up(-(-B // 2), 8))
    B_pad = _round_up(B, tm)
    if B_pad != B:
        pad = B_pad - B
        u_emb = jnp.pad(u_emb, ((0, pad), (0, 0)))
        i_emb = jnp.pad(i_emb, ((0, pad), (0, 0)))
    n_tiles = B_pad // tm

    # Per-tile stacking: tile t owns rows [2*t*tm, 2*t*tm+tm) (users) and
    # [2*t*tm+tm, 2*(t+1)*tm) (items) of the fused [2*B_pad, D] operand, so one
    # BlockSpec of (2*tm, D) feeds a single MXU call per grid step.
    ui = jnp.concatenate(
        [u_emb.reshape(n_tiles, tm, D), i_emb.reshape(n_tiles, tm, D)], axis=1
    ).reshape(n_tiles * 2 * tm, D)

    out_dtype = jnp.float32
    cdt_bytes = jnp.dtype(u_emb.dtype).itemsize
    w_bytes = jnp.dtype(w_t.dtype).itemsize

    cost = pl.CostEstimate(
        flops=2 * (2 * B_pad) * D * N + 4 * B_pad * N,
        transcendentals=0,
        bytes_accessed=(
            2 * B_pad * D * cdt_bytes   # fused user+item embedding rows
            + D * N * w_bytes           # weight fetched from HBM once (resident block)
            + N * 4                     # bias fetched once
            + B_pad * 4                 # matching scores
        ),
    )

    # Right-sized VMEM budget: double-buffered input/output blocks + f32 intermediates + slack.
    vmem_limit = int(
        2 * (2 * tm * D * cdt_bytes          # ui block
             + D * N * w_bytes               # weight block
             + 8 * N * 4                     # bias block (sublane-padded)
             + tm * 128 * 4)                 # output block (lane-padded)
        + 3 * (2 * tm) * N * 4               # proj / product f32 temporaries
        + (2 << 20)                          # headroom for compiler scratch
    )
    vmem_limit = min(max(vmem_limit, 4 << 20), 64 << 20)

    out = pl.pallas_call(
        _mf_matching_kernel,
        out_shape=jax.ShapeDtypeStruct((B_pad, 1), out_dtype),
        grid_spec=pltpu.PrefetchScalarGridSpec(
            num_scalar_prefetch=0,
            grid=(n_tiles,),
            in_specs=[
                pl.BlockSpec((2 * tm, D), lambda i: (i, 0)),  # fused user+item rows per tile
                pl.BlockSpec((D, N), lambda i: (0, 0)),       # shared weight: resident, fetched once
                pl.BlockSpec((1, N), lambda i: (0, 0)),       # bias: resident, fetched once
            ],
            out_specs=pl.BlockSpec((tm, 1), lambda i: (i, 0)),
        ),
        compiler_params=pltpu.CompilerParams(
            dimension_semantics=("parallel",),
            vmem_limit_bytes=vmem_limit,
        ),
        cost_estimate=cost,
    )(ui, w_t, b2)

    # Padded rows carry a b.b score; this slice masks them -- do not remove.
    return out[:B, 0]


class MFLinearPallas:
    """JAX/Pallas equivalent of MF_linear: embedding tables + shared 4096-dim projection + dot-score."""

    def __init__(self, num_users, num_items, emb_dim, key, *, out_dim=4096,
                 param_dtype=jnp.bfloat16, block_b=256):
        ku, ki, kw, kb = jax.random.split(key, 4)
        # nn.Embedding default init: N(0, 1).
        self.user_table = jax.random.normal(ku, (num_users, emb_dim), jnp.float32)
        self.item_table = jax.random.normal(ki, (num_items, emb_dim), jnp.float32)
        # nn.Linear default init: U(-1/sqrt(in), 1/sqrt(in)).
        bound = 1.0 / (emb_dim ** 0.5)
        w = jax.random.uniform(kw, (out_dim, emb_dim), jnp.float32, -bound, bound)
        b = jax.random.uniform(kb, (out_dim,), jnp.float32, -bound, bound)

        # Unpadded f32 copies (used by the reference check).
        self.w_t = jnp.asarray(w.T)          # [D, N]  pre-transposed for x @ W.T
        self.b = jnp.asarray(b)              # [N]
        self.out_dim = out_dim
        self.block_b = block_b
        self.compute_dtype = param_dtype

        # Kernel-ready params: pre-transposed, lane-padded to a multiple of 128 once at init
        # (zero columns contribute exactly 0 to the matching score), weight cast to the MXU dtype.
        n_pad = _round_up(out_dim, 128)
        self.w_t_k = jnp.pad(self.w_t, ((0, 0), (0, n_pad - out_dim))).astype(param_dtype)
        self.b_k = jnp.pad(self.b, (0, n_pad - out_dim)).reshape(1, n_pad).astype(jnp.float32)

    def __call__(self, users, items):
        # Embedding lookups (plain-JAX gather) + one cast to the MXU dtype, then the fused kernel.
        u_emb = jnp.take(self.user_table, users, axis=0).astype(self.compute_dtype)
        i_emb = jnp.take(self.item_table, items, axis=0).astype(self.compute_dtype)
        return mf_matching(u_emb, i_emb, self.w_t_k, self.b_k, block_b=self.block_b)


def mf_linear_reference(users, items, user_table, item_table, w_t, b):
    """Plain-JAX reference with the same dtype pipeline as the kernel."""
    u = jnp.take(user_table, users, axis=0).astype(w_t.dtype)
    it = jnp.take(item_table, items, axis=0).astype(w_t.dtype)
    u_p = jnp.dot(u, w_t, preferred_element_type=jnp.float32) + b
    i_p = jnp.dot(it, w_t, preferred_element_type=jnp.float32) + b
    return jnp.sum(u_p * i_p, axis=-1)


if __name__ == "__main__":
    key = jax.random.PRNGKey(0)
    k_model, k_users, k_items, k_users2, k_items2 = jax.random.split(key, 5)

    num_users, num_items, emb_dim, out_dim = 64, 96, 64, 4096

    # --- bf16 weight path (default on all chips), batch not a multiple of 8 -> padding path ---
    batch = 5
    users = jax.random.randint(k_users, (batch,), 0, num_users, dtype=jnp.int32)
    items = jax.random.randint(k_items, (batch,), 0, num_items, dtype=jnp.int32)

    model_bf16 = MFLinearPallas(num_users, num_items, emb_dim, k_model,
                                out_dim=out_dim, param_dtype=jnp.bfloat16)
    out_bf16 = jax.block_until_ready(model_bf16(users, items))
    ref_bf16 = mf_linear_reference(users, items, model_bf16.user_table, model_bf16.item_table,
                                   model_bf16.w_t.astype(jnp.bfloat16), model_bf16.b)
    assert out_bf16.shape == (batch,), out_bf16.shape
    assert jnp.allclose(out_bf16, ref_bf16, rtol=1e-2, atol=1e-2), "bf16 mismatch vs reference"

    # --- multi-tile path (B > 8 splits into 2 batch tiles -> both v7x cores, padding again) ---
    batch2 = 20
    users2 = jax.random.randint(k_users2, (batch2,), 0, num_users, dtype=jnp.int32)
    items2 = jax.random.randint(k_items2, (batch2,), 0, num_items, dtype=jnp.int32)
    out2 = jax.block_until_ready(model_bf16(users2, items2))
    ref2 = mf_linear_reference(users2, items2, model_bf16.user_table, model_bf16.item_table,
                               model_bf16.w_t.astype(jnp.bfloat16), model_bf16.b)
    assert out2.shape == (batch2,), out2.shape
    assert jnp.allclose(out2, ref2, rtol=1e-2, atol=1e-2), "bf16 multi-tile mismatch vs reference"

    # --- pure-f32 path (bit-faithful nn.Linear semantics) with identical deterministic params ---
    model_f32 = MFLinearPallas(num_users, num_items, emb_dim, k_model,
                               out_dim=out_dim, param_dtype=jnp.float32)
    out_f32 = jax.block_until_ready(model_f32(users, items))
    ref_f32 = mf_linear_reference(users, items, model_f32.user_table, model_f32.item_table,
                                  model_f32.w_t, model_f32.b)
    assert out_f32.shape == (batch,), out_f32.shape
    assert jnp.allclose(out_f32, ref_f32, rtol=1e-2, atol=1e-2), "f32 mismatch vs reference"

    print("KERNEL_OK")
</pallas_src>

<mosaic_0001>
module attributes {stable_mosaic.version = 11 : i64} {
  func.func @_mf_matching_kernel(%arg0: i32, %arg1: memref<16x64xbf16, #tpu.memory_space<vmem>>, %arg2: memref<64x4096xbf16, #tpu.memory_space<vmem>>, %arg3: memref<1x4096xf32, #tpu.memory_space<vmem>>, %arg4: memref<8x1xf32, #tpu.memory_space<vmem>>) attributes {dimension_semantics = [#tpu.dimension_semantics<parallel>], iteration_bounds = array<i64: 1>, scalar_prefetch = 0 : i64, scratch_operands = 0 : i64, tpu.core_type = #tpu.core_type<tc>, window_params = [{transform_indices = @transform_0, window_bounds = array<i64: 16, 64>}, {pipeline_mode = #tpu.pipeline_mode<synchronous>, transform_indices = @transform_1, window_bounds = array<i64: 64, 4096>}, {pipeline_mode = #tpu.pipeline_mode<synchronous>, transform_indices = @transform_2, window_bounds = array<i64: 1, 4096>}, {transform_indices = @transform_3, window_bounds = array<i64: 8, 1>}]} {
    %c0 = arith.constant 0 : index
    %c0_0 = arith.constant 0 : index
    %0 = vector.load %arg1[%c0, %c0_0] : memref<16x64xbf16, #tpu.memory_space<vmem>>, vector<16x64xbf16>
    %c0_1 = arith.constant 0 : index
    %c0_2 = arith.constant 0 : index
    %1 = vector.load %arg2[%c0_1, %c0_2] : memref<64x4096xbf16, #tpu.memory_space<vmem>>, vector<64x4096xbf16>
    %cst = arith.constant dense<0.000000e+00> : vector<16x4096xf32>
    %2 = tpu.matmul %0, %1, %cst {dimension_numbers = #tpu.dot_dimension_numbers<[1], [0], [0], [1], [0, 0, 1, 1], [], []>} : vector<16x64xbf16>, vector<64x4096xbf16>, vector<16x4096xf32> -> vector<16x4096xf32>
    %c0_3 = arith.constant 0 : index
    %c0_4 = arith.constant 0 : index
    %3 = vector.load %arg3[%c0_3, %c0_4] : memref<1x4096xf32, #tpu.memory_space<vmem>>, vector<1x4096xf32>
    %4 = vector.broadcast %3 : vector<1x4096xf32> to vector<16x4096xf32>
    %5 = arith.addf %2, %4 : vector<16x4096xf32>
    %6 = vector.extract_strided_slice %5 {offsets = [0, 0], sizes = [8, 4096], strides = [1, 1]} : vector<16x4096xf32> to vector<8x4096xf32>
    %7 = vector.extract_strided_slice %5 {offsets = [8, 0], sizes = [8, 4096], strides = [1, 1]} : vector<16x4096xf32> to vector<8x4096xf32>
    %8 = arith.mulf %6, %7 : vector<8x4096xf32>
    %cst_5 = arith.constant dense<0.000000e+00> : vector<8xf32>
    %9 = vector.multi_reduction <add>, %8, %cst_5 [1] : vector<8x4096xf32> to vector<8xf32>
    %10 = vector.shape_cast %9 : vector<8xf32> to vector<8x1xf32>
    %c0_6 = arith.constant 0 : index
    %c0_7 = arith.constant 0 : index
    %11 = vector.load %arg4[%c0_6, %c0_7] : memref<8x1xf32, #tpu.memory_space<vmem>>, vector<8x1xf32>
    tpu.vector_store %arg4[%c0_6, %c0_7], %10 {strides = array<i32>} : memref<8x1xf32, #tpu.memory_space<vmem>>, vector<8x1xf32>,
    return
  }
  func.func @transform_0(%arg0: i32) -> (i32, i32) {
    %c0_i32 = arith.constant 0 : i32
    %c0_i32_0 = arith.constant 0 : i32
    return %arg0, %c0_i32 : i32, i32
  }
  func.func @transform_1(%arg0: i32) -> (i32, i32) {
    %c0_i32 = arith.constant 0 : i32
    %c0_i32_0 = arith.constant 0 : i32
    %c0_i32_1 = arith.constant 0 : i32
    return %c0_i32, %c0_i32_0 : i32, i32
  }
  func.func @transform_2(%arg0: i32) -> (i32, i32) {
    %c0_i32 = arith.constant 0 : i32
    %c0_i32_0 = arith.constant 0 : i32
    %c0_i32_1 = arith.constant 0 : i32
    return %c0_i32, %c0_i32_0 : i32, i32
  }
  func.func @transform_3(%arg0: i32) -> (i32, i32) {
    %c0_i32 = arith.constant 0 : i32
    %c0_i32_0 = arith.constant 0 : i32
    return %arg0, %c0_i32 : i32, i32
  }
}

</mosaic_0001>

<llo_original>
// kernel: tpu_custom_call.1
$region0: #{tpu_custom_call.1}
  #allocation0 [shape = 'u32[]', space=smem, size = 0x4, offset = 0x4, fixed_abs, tag = 'smem constant byte address 0x4 - core index']
  #allocation1 [shape = 'u32[144,128]{1,0:T(1,128)}', space=vmem, size = 0x12000, scoped, tag = 'internal scratch']
  %s0 = inlined_call_operand.hbm [shape: bf16[16,64], index: 0, kind: input, shape index: {}]
  %s1 = inlined_call_operand.hbm [shape: bf16[64,4096], index: 1, kind: input, shape index: {}]
  %s2 = inlined_call_operand.hbm [shape: f32[1,4096], index: 2, kind: input, shape index: {}]
  %s3 = inlined_call_operand.vmem [shape: f32[8,1], index: 3, kind: output, shape index: {}]
  %s4 = sld [smem:[#allocation0]]
  $region34: #{tpu_custom_call.1} parent=0
    _
  %s6 = ssub.s32 1, %s4
  %s7 = scalar_select 0, %s6, %s4
  $region1: #{tpu_custom_call.1} parent=0
    #allocation2 [shape = 'u8[4096]{0}', space=vmem, size = 0x1000, scoped, tag = 'input window, operand 0, single buffered']
    #allocation3 [shape = 's32[1]{0}', space=sflag, size = 0x4, scoped, tag = 'scoped memory for tpu_custom_call.1']
    #allocation4 [shape = 'u8[524288]{0}', space=vmem, size = 0x80000, scoped, tag = 'input window, operand 1, single buffered']
    #allocation5 [shape = 's32[1]{0}', space=sflag, size = 0x4, scoped, tag = 'scoped memory for tpu_custom_call.1']
    #allocation6 [shape = 'u8[16384]{0}', space=vmem, size = 0x4000, scoped, tag = 'input window, operand 2, single buffered']
    %8 = vsyncpa [#allocation3], 0
    %9 = vsyncpa [#allocation5], 0
    // Predicated region
    $region2: #{tpu_custom_call.1} parent=1 // pred_check
      _
    $region3: #{tpu_custom_call.1} parent=1 // pred_check_branch
      %11 = sbr.rel (0) target = $region5
    $region4: #{tpu_custom_call.1} parent=1 // pred_region
      %s13 = ssub.s32 128, 128
      %14 = vsyncadd [#allocation3], %s13
      %s15 = sshll.u32 [#allocation2], 4
      %s16 = int_to_ptr.vmem [resolvable:$true] %s15
      %21 = dma.hbm_to_vmem [thread:$0]  %s0, 128, %s16, [#allocation3], 64, 64, 4
    $region5: #{tpu_custom_call.1} parent=1 // pred_fallthru
      _
    // Predicated region
    $region6: #{tpu_custom_call.1} parent=1 // pred_check
      _
    $region7: #{tpu_custom_call.1} parent=1 // pred_check_branch
      %23 = sbr.rel (0) target = $region9
    $region8: #{tpu_custom_call.1} parent=1 // pred_region
      %s25 = ssub.s32 16384, 16384
      %26 = vsyncadd [#allocation5], %s25
      %s27 = sshll.u32 [#allocation4], 4
      %s28 = int_to_ptr.vmem [resolvable:$true] %s27
      %33 = dma.hbm_to_vmem [thread:$0]  %s1, 16384, %s28, [#allocation5], 2048, 2048, 128
    $region9: #{tpu_custom_call.1} parent=1 // pred_fallthru
      _
    // Predicated region
    $region10: #{tpu_custom_call.1} parent=1 // pred_check
      _
    $region11: #{tpu_custom_call.1} parent=1 // pred_check_branch
      %35 = sbr.rel (0) target = $region13
    $region12: #{tpu_custom_call.1} parent=1 // pred_region
      %s37 = ssub.s32 512, 512
      %38 = vsyncadd [#allocation5], %s37
      %s40 = sshll.u32 [#allocation6], 4
      %s41 = int_to_ptr.vmem [resolvable:$true] %s40
      %43 = dma.hbm_to_vmem [thread:$0]  %s2, 512, %s41, [#allocation5]
    $region13: #{tpu_custom_call.1} parent=1 // pred_fallthru
      _
    // Predicated region
    $region14: #{tpu_custom_call.1} parent=1 // pred_check
      _
    $region15: #{tpu_custom_call.1} parent=1 // pred_check_branch
      %45 = sbr.rel (0) target = $region17
    $region16: #{tpu_custom_call.1} parent=1 // pred_region
      %46 = dma.done [#allocation3], 128
    $region17: #{tpu_custom_call.1} parent=1 // pred_fallthru
      _
    // Predicated region
    $region18: #{tpu_custom_call.1} parent=1 // pred_check
      _
    $region19: #{tpu_custom_call.1} parent=1 // pred_check_branch
      %48 = sbr.rel (0) target = $region21
    $region20: #{tpu_custom_call.1} parent=1 // pred_region
      %49 = dma.done [#allocation5], 16384
    $region21: #{tpu_custom_call.1} parent=1 // pred_fallthru
      _
    // Predicated region
    $region22: #{tpu_custom_call.1} parent=1 // pred_check
      _
    $region23: #{tpu_custom_call.1} parent=1 // pred_check_branch
      %51 = sbr.rel (0) target = $region25
    $region24: #{tpu_custom_call.1} parent=1 // pred_region
      %52 = dma.done [#allocation5], 512
    $region25: #{tpu_custom_call.1} parent=1 // pred_fallthru
      _
    %v54 = vld [vmem:[#allocation2] sm:$0xf]
    %v55 = vld [vmem:[#allocation2 + $0x4] sm:$0xf]
    %v56 = vld [vmem:[#allocation4] sm:$0xff]
    %v57 = vld [vmem:[#allocation4 + $0x8] sm:$0xff]
    %v58 = vld [vmem:[#allocation4 + $0x10] sm:$0xff]
    %v59 = vld [vmem:[#allocation4 + $0x18] sm:$0xff]
    %v60 = vld [vmem:[#allocation4 + $0x20] sm:$0xff]
    %v61 = vld [vmem:[#allocation4 + $0x28] sm:$0xff]
    %v62 = vld [vmem:[#allocation4 + $0x30] sm:$0xff]
    %v63 = vld [vmem:[#allocation4 + $0x38] sm:$0xff]
    %v64 = vld [vmem:[#allocation4 + $0x40] sm:$0xff]
    %v65 = vld [vmem:[#allocation4 + $0x48] sm:$0xff]
    %v66 = vld [vmem:[#allocation4 + $0x50] sm:$0xff]
    %v67 = vld [vmem:[#allocation4 + $0x58] sm:$0xff]
    %v68 = vld [vmem:[#allocation4 + $0x60] sm:$0xff]
    %v69 = vld [vmem:[#allocation4 + $0x68] sm:$0xff]
    %v70 = vld [vmem:[#allocation4 + $0x70] sm:$0xff]
    %v71 = vld [vmem:[#allocation4 + $0x78] sm:$0xff]
    %v72 = vld [vmem:[#allocation4 + $0x80] sm:$0xff]
    %v73 = vld [vmem:[#allocation4 + $0x88] sm:$0xff]
    %v74 = vld [vmem:[#allocation4 + $0x90] sm:$0xff]
    %v75 = vld [vmem:[#allocation4 + $0x98] sm:$0xff]
    %v76 = vld [vmem:[#allocation4 + $0xa0] sm:$0xff]
    %v77 = vld [vmem:[#allocation4 + $0xa8] sm:$0xff]
    %v78 = vld [vmem:[#allocation4 + $0xb0] sm:$0xff]
    %v79 = vld [vmem:[#allocation4 + $0xb8] sm:$0xff]
    %v80 = vld [vmem:[#allocation4 + $0xc0] sm:$0xff]
    %v81 = vld [vmem:[#allocation4 + $0xc8] sm:$0xff]
    %v82 = vld [vmem:[#allocation4 + $0xd0] sm:$0xff]
    %v83 = vld [vmem:[#allocation4 + $0xd8] sm:$0xff]
    %v84 = vld [vmem:[#allocation4 + $0xe0] sm:$0xff]
    %v85 = vld [vmem:[#allocation4 + $0xe8] sm:$0xff]
    %v86 = vld [vmem:[#allocation4 + $0xf0] sm:$0xff]
    %v87 = vld [vmem:[#allocation4 + $0xf8] sm:$0xff]
    %v88 = vld [vmem:[#allocation4 + $0x100] sm:$0xff]
    %v89 = vld [vmem:[#allocation4 + $0x108] sm:$0xff]
    %v90 = vld [vmem:[#allocation4 + $0x110] sm:$0xff]
    %v91 = vld [vmem:[#allocation4 + $0x118] sm:$0xff]
    %v92 = vld [vmem:[#allocation4 + $0x120] sm:$0xff]
    %v93 = vld [vmem:[#allocation4 + $0x128] sm:$0xff]
    %v94 = vld [vmem:[#allocation4 + $0x130] sm:$0xff]
    %v95 = vld [vmem:[#allocation4 + $0x138] sm:$0xff]
    %v96 = vld [vmem:[#allocation4 + $0x140] sm:$0xff]
    %v97 = vld [vmem:[#allocation4 + $0x148] sm:$0xff]
    %v98 = vld [vmem:[#allocation4 + $0x150] sm:$0xff]
    %v99 = vld [vmem:[#allocation4 + $0x158] sm:$0xff]
    %v100 = vld [vmem:[#allocation4 + $0x160] sm:$0xff]
    %v101 = vld [vmem:[#allocation4 + $0x168] sm:$0xff]
    %v102 = vld [vmem:[#allocation4 + $0x170] sm:$0xff]
    %v103 = vld [vmem:[#allocation4 + $0x178] sm:$0xff]
    %v104 = vld [vmem:[#allocation4 + $0x180] sm:$0xff]
    %v105 = vld [vmem:[#allocation4 + $0x188] sm:$0xff]
    %v106 = vld [vmem:[#allocation4 + $0x190] sm:$0xff]
    %v107 = vld [vmem:[#allocation4 + $0x198] sm:$0xff]
    %v108 = vld [vmem:[#allocation4 + $0x1a0] sm:$0xff]
    %v109 = vld [vmem:[#allocation4 + $0x1a8] sm:$0xff]
    %v110 = vld [vmem:[#allocation4 + $0x1b0] sm:$0xff]
    %v111 = vld [vmem:[#allocation4 + $0x1b8] sm:$0xff]
    %v112 = vld [vmem:[#allocation4 + $0x1c0] sm:$0xff]
    %v113 = vld [vmem:[#allocation4 + $0x1c8] sm:$0xff]
    %v114 = vld [vmem:[#allocation4 + $0x1d0] sm:$0xff]
    %v115 = vld [vmem:[#allocation4 + $0x1d8] sm:$0xff]
    %v116 = vld [vmem:[#allocation4 + $0x1e0] sm:$0xff]
    %v117 = vld [vmem:[#allocation4 + $0x1e8] sm:$0xff]
    %v118 = vld [vmem:[#allocation4 + $0x1f0] sm:$0xff]
    %v119 = vld [vmem:[#allocation4 + $0x1f8] sm:$0xff]
    %v120 = vld [vmem:[#allocation4 + $0x200] sm:$0xff]
    %v121 = vld [vmem:[#allocation4 + $0x208] sm:$0xff]
    %v122 = vld [vmem:[#allocation4 + $0x210] sm:$0xff]
    %v123 = vld [vmem:[#allocation4 + $0x218] sm:$0xff]
    %v124 = vld [vmem:[#allocation4 + $0x220] sm:$0xff]
    %v125 = vld [vmem:[#allocation4 + $0x228] sm:$0xff]
    %v126 = vld [vmem:[#allocation4 + $0x230] sm:$0xff]
    %v127 = vld [vmem:[#allocation4 + $0x238] sm:$0xff]
    %v128 = vld [vmem:[#allocation4 + $0x240] sm:$0xff]
    %v129 = vld [vmem:[#allocation4 + $0x248] sm:$0xff]
    %v130 = vld [vmem:[#allocation4 + $0x250] sm:$0xff]
    %v131 = vld [vmem:[#allocation4 + $0x258] sm:$0xff]
    %v132 = vld [vmem:[#allocation4 + $0x260] sm:$0xff]
    %v133 = vld [vmem:[#allocation4 + $0x268] sm:$0xff]
    %v134 = vld [vmem:[#allocation4 + $0x270] sm:$0xff]
    %v135 = vld [vmem:[#allocation4 + $0x278] sm:$0xff]
    %v136 = vld [vmem:[#allocation4 + $0x280] sm:$0xff]
    %v137 = vld [vmem:[#allocation4 + $0x288] sm:$0xff]
    %v138 = vld [vmem:[#allocation4 + $0x290] sm:$0xff]
    %v139 = vld [vmem:[#allocation4 + $0x298] sm:$0xff]
    %v140 = vld [vmem:[#allocation4 + $0x2a0] sm:$0xff]
    %v141 = vld [vmem:[#allocation4 + $0x2a8] sm:$0xff]
    %v142 = vld [vmem:[#allocation4 + $0x2b0] sm:$0xff]
    %v143 = vld [vmem:[#allocation4 + $0x2b8] sm:$0xff]
    %v144 = vld [vmem:[#allocation4 + $0x2c0] sm:$0xff]
    %v145 = vld [vmem:[#allocation4 + $0x2c8] sm:$0xff]
    %v146 = vld [vmem:[#allocation4 + $0x2d0] sm:$0xff]
    %v147 = vld [vmem:[#allocation4 + $0x2d8] sm:$0xff]
    %v148 = vld [vmem:[#allocation4 + $0x2e0] sm:$0xff]
    %v149 = vld [vmem:[#allocation4 + $0x2e8] sm:$0xff]
    %v150 = vld [vmem:[#allocation4 + $0x2f0] sm:$0xff]
    %v151 = vld [vmem:[#allocation4 + $0x2f8] sm:$0xff]
    %v152 = vld [vmem:[#allocation4 + $0x300] sm:$0xff]
    %v153 = vld [vmem:[#allocation4 + $0x308] sm:$0xff]
    %v154 = vld [vmem:[#allocation4 + $0x310] sm:$0xff]
    %v155 = vld [vmem:[#allocation4 + $0x318] sm:$0xff]
    %v156 = vld [vmem:[#allocation4 + $0x320] sm:$0xff]
    %v157 = vld [vmem:[#allocation4 + $0x328] sm:$0xff]
    %v158 = vld [vmem:[#allocation4 + $0x330] sm:$0xff]
    %v159 = vld [vmem:[#allocation4 + $0x338] sm:$0xff]
    %v160 = vld [vmem:[#allocation4 + $0x340] sm:$0xff]
    %v161 = vld [vmem:[#allocation4 + $0x348] sm:$0xff]
    %v162 = vld [vmem:[#allocation4 + $0x350] sm:$0xff]
    %v163 = vld [vmem:[#allocation4 + $0x358] sm:$0xff]
    %v164 = vld [vmem:[#allocation4 + $0x360] sm:$0xff]
    %v165 = vld [vmem:[#allocation4 + $0x368] sm:$0xff]
    %v166 = vld [vmem:[#allocation4 + $0x370] sm:$0xff]
    %v167 = vld [vmem:[#allocation4 + $0x378] sm:$0xff]
    %v168 = vld [vmem:[#allocation4 + $0x380] sm:$0xff]
    %v169 = vld [vmem:[#allocation4 + $0x388] sm:$0xff]
    %v170 = vld [vmem:[#allocation4 + $0x390] sm:$0xff]
    %v171 = vld [vmem:[#allocation4 + $0x398] sm:$0xff]
    %v172 = vld [vmem:[#allocation4 + $0x3a0] sm:$0xff]
    %v173 = vld [vmem:[#allocation4 + $0x3a8] sm:$0xff]
    %v174 = vld [vmem:[#allocation4 + $0x3b0] sm:$0xff]
    %v175 = vld [vmem:[#allocation4 + $0x3b8] sm:$0xff]
    %v176 = vld [vmem:[#allocation4 + $0x3c0] sm:$0xff]
    %v177 = vld [vmem:[#allocation4 + $0x3c8] sm:$0xff]
    %v178 = vld [vmem:[#allocation4 + $0x3d0] sm:$0xff]
    %v179 = vld [vmem:[#allocation4 + $0x3d8] sm:$0xff]
    %v180 = vld [vmem:[#allocation4 + $0x3e0] sm:$0xff]
    %v181 = vld [vmem:[#allocation4 + $0x3e8] sm:$0xff]
    %v182 = vld [vmem:[#allocation4 + $0x3f0] sm:$0xff]
    %v183 = vld [vmem:[#allocation4 + $0x3f8] sm:$0xff]
    %v184 = vld [vmem:[#allocation6] sm:$0xff]
    %v185 = vld [vmem:[#allocation6 + $0x8] sm:$0xff]
    %v186 = vld [vmem:[#allocation6 + $0x10] sm:$0xff]
    %v187 = vld [vmem:[#allocation6 + $0x18] sm:$0xff]
    %v192 = vlaneseq
    %v193 = vshrl.u32 %v192, 7
    %v194 = vsub.s32 0, %v193
    %v195 = vrot.slane %v184, %v194
    %v196 = vlaneseq
    %v197 = vshrl.u32 %v196, 7
    %v198 = vsub.s32 1, %v197
    %v199 = vrot.slane %v184, %v198
    %v200 = vlaneseq
    %v201 = vshrl.u32 %v200, 7
    %v202 = vsub.s32 2, %v201
    %v203 = vrot.slane %v184, %v202
    %v204 = vlaneseq
    %v205 = vshrl.u32 %v204, 7
    %v206 = vsub.s32 3, %v205
    %v207 = vrot.slane %v184, %v206
    %v208 = vlaneseq
    %v209 = vshrl.u32 %v208, 7
    %v210 = vsub.s32 4, %v209
    %v211 = vrot.slane %v184, %v210
    %v212 = vlaneseq
    %v213 = vshrl.u32 %v212, 7
    %v214 = vsub.s32 5, %v213
    %v215 = vrot.slane %v184, %v214
    %v216 = vlaneseq
    %v217 = vshrl.u32 %v216, 7
    %v218 = vsub.s32 6, %v217
    %v219 = vrot.slane %v184, %v218
    %v220 = vlaneseq
    %v221 = vshrl.u32 %v220, 7
    %v222 = vsub.s32 7, %v221
    %v223 = vrot.slane %v184, %v222
    %v224 = vlaneseq
    %v225 = vshrl.u32 %v224, 7
    %v226 = vsub.s32 0, %v225
    %v227 = vrot.slane %v185, %v226
    %v228 = vlaneseq
    %v229 = vshrl.u32 %v228, 7
    %v230 = vsub.s32 1, %v229
    %v231 = vrot.slane %v185, %v230
    %v232 = vlaneseq
    %v233 = vshrl.u32 %v232, 7
    %v234 = vsub.s32 2, %v233
    %v235 = vrot.slane %v185, %v234
    %v236 = vlaneseq
    %v237 = vshrl.u32 %v236, 7
    %v238 = vsub.s32 3, %v237
    %v239 = vrot.slane %v185, %v238
    %v240 = vlaneseq
    %v241 = vshrl.u32 %v240, 7
    %v242 = vsub.s32 4, %v241
    %v243 = vrot.slane %v185, %v242
    %v244 = vlaneseq
    %v245 = vshrl.u32 %v244, 7
    %v246 = vsub.s32 5, %v245
    %v247 = vrot.slane %v185, %v246
    %v248 = vlaneseq
    %v249 = vshrl.u32 %v248, 7
    %v250 = vsub.s32 6, %v249
    %v251 = vrot.slane %v185, %v250
    %v252 = vlaneseq
    %v253 = vshrl.u32 %v252, 7
    %v254 = vsub.s32 7, %v253
    %v255 = vrot.slane %v185, %v254
    %v256 = vlaneseq
    %v257 = vshrl.u32 %v256, 7
    %v258 = vsub.s32 0, %v257
    %v259 = vrot.slane %v186, %v258
    %v260 = vlaneseq
    %v261 = vshrl.u32 %v260, 7
    %v262 = vsub.s32 1, %v261
    %v263 = vrot.slane %v186, %v262
    %v264 = vlaneseq
    %v265 = vshrl.u32 %v264, 7
    %v266 = vsub.s32 2, %v265
    %v267 = vrot.slane %v186, %v266
    %v268 = vlaneseq
    %v269 = vshrl.u32 %v268, 7
    %v270 = vsub.s32 3, %v269
    %v271 = vrot.slane %v186, %v270
    %v272 = vlaneseq
    %v273 = vshrl.u32 %v272, 7
    %v274 = vsub.s32 4, %v273
    %v275 = vrot.slane %v186, %v274
    %v276 = vlaneseq
    %v277 = vshrl.u32 %v276, 7
    %v278 = vsub.s32 5, %v277
    %v279 = vrot.slane %v186, %v278
    %v280 = vlaneseq
    %v281 = vshrl.u32 %v280, 7
    %v282 = vsub.s32 6, %v281
    %v283 = vrot.slane %v186, %v282
    %v284 = vlaneseq
    %v285 = vshrl.u32 %v284, 7
    %v286 = vsub.s32 7, %v285
    %v287 = vrot.slane %v186, %v286
    %v288 = vlaneseq
    %v289 = vshrl.u32 %v288, 7
    %v290 = vsub.s32 0, %v289
    %v291 = vrot.slane %v187, %v290
    %v292 = vlaneseq
    %v293 = vshrl.u32 %v292, 7
    %v294 = vsub.s32 1, %v293
    %v295 = vrot.slane %v187, %v294
    %v296 = vlaneseq
    %v297 = vshrl.u32 %v296, 7
    %v298 = vsub.s32 2, %v297
    %v299 = vrot.slane %v187, %v298
    %v300 = vlaneseq
    %v301 = vshrl.u32 %v300, 7
    %v302 = vsub.s32 3, %v301
    %v303 = vrot.slane %v187, %v302
    %v304 = vlaneseq
    %v305 = vshrl.u32 %v304, 7
    %v306 = vsub.s32 4, %v305
    %v307 = vrot.slane %v187, %v306
    %v308 = vlaneseq
    %v309 = vshrl.u32 %v308, 7
    %v310 = vsub.s32 5, %v309
    %v311 = vrot.slane %v187, %v310
    %v312 = vlaneseq
    %v313 = vshrl.u32 %v312, 7
    %v314 = vsub.s32 6, %v313
    %v315 = vrot.slane %v187, %v314
    %v316 = vlaneseq
    %v317 = vshrl.u32 %v316, 7
    %v318 = vsub.s32 7, %v317
    %v319 = vrot.slane %v187, %v318
    %v354 = vunpack.c.l.b16 %v54
    %v355 = vunpack.c.l.b16 %v55
    %v356 = vpack.c.b16 %v355, %v354
    %v485 = vunpack.c.l.b16 %v56
    %v486 = vunpack.c.h.b16 %v56
    %v487 = vunpack.c.l.b16 %v57
    %v488 = vunpack.c.h.b16 %v57
    %v489 = vunpack.c.l.b16 %v58
    %v490 = vunpack.c.h.b16 %v58
    %v491 = vunpack.c.l.b16 %v59
    %v492 = vunpack.c.h.b16 %v59
    %v493 = vunpack.c.l.b16 %v60
    %v494 = vunpack.c.h.b16 %v60
    %v495 = vunpack.c.l.b16 %v61
    %v496 = vunpack.c.h.b16 %v61
    %v497 = vunpack.c.l.b16 %v62
    %v498 = vunpack.c.h.b16 %v62
    %v499 = vunpack.c.l.b16 %v63
    %v500 = vunpack.c.h.b16 %v63
    %v501 = vunpack.c.l.b16 %v64
    %v502 = vunpack.c.h.b16 %v64
    %v503 = vunpack.c.l.b16 %v65
    %v504 = vunpack.c.h.b16 %v65
    %v505 = vunpack.c.l.b16 %v66
    %v506 = vunpack.c.h.b16 %v66
    %v507 = vunpack.c.l.b16 %v67
    %v508 = vunpack.c.h.b16 %v67
    %v509 = vunpack.c.l.b16 %v68
    %v510 = vunpack.c.h.b16 %v68
    %v511 = vunpack.c.l.b16 %v69
    %v512 = vunpack.c.h.b16 %v69
    %v513 = vunpack.c.l.b16 %v70
    %v514 = vunpack.c.h.b16 %v70
    %v515 = vunpack.c.l.b16 %v71
    %v516 = vunpack.c.h.b16 %v71
    %v517 = vunpack.c.l.b16 %v72
    %v518 = vunpack.c.h.b16 %v72
    %v519 = vunpack.c.l.b16 %v73
    %v520 = vunpack.c.h.b16 %v73
    %v521 = vunpack.c.l.b16 %v74
    %v522 = vunpack.c.h.b16 %v74
    %v523 = vunpack.c.l.b16 %v75
    %v524 = vunpack.c.h.b16 %v75
    %v525 = vunpack.c.l.b16 %v76
    %v526 = vunpack.c.h.b16 %v76
    %v527 = vunpack.c.l.b16 %v77
    %v528 = vunpack.c.h.b16 %v77
    %v529 = vunpack.c.l.b16 %v78
    %v530 = vunpack.c.h.b16 %v78
    %v531 = vunpack.c.l.b16 %v79
    %v532 = vunpack.c.h.b16 %v79
    %v533 = vunpack.c.l.b16 %v80
    %v534 = vunpack.c.h.b16 %v80
    %v535 = vunpack.c.l.b16 %v81
    %v536 = vunpack.c.h.b16 %v81
    %v537 = vunpack.c.l.b16 %v82
    %v538 = vunpack.c.h.b16 %v82
    %v539 = vunpack.c.l.b16 %v83
    %v540 = vunpack.c.h.b16 %v83
    %v541 = vunpack.c.l.b16 %v84
    %v542 = vunpack.c.h.b16 %v84
    %v543 = vunpack.c.l.b16 %v85
    %v544 = vunpack.c.h.b16 %v85
    %v545 = vunpack.c.l.b16 %v86
    %v546 = vunpack.c.h.b16 %v86
    %v547 = vunpack.c.l.b16 %v87
    %v548 = vunpack.c.h.b16 %v87
    %v549 = vunpack.c.l.b16 %v88
    %v550 = vunpack.c.h.b16 %v88
    %v551 = vunpack.c.l.b16 %v89
    %v552 = vunpack.c.h.b16 %v89
    %v553 = vunpack.c.l.b16 %v90
    %v554 = vunpack.c.h.b16 %v90
    %v555 = vunpack.c.l.b16 %v91
    %v556 = vunpack.c.h.b16 %v91
    %v557 = vunpack.c.l.b16 %v92
    %v558 = vunpack.c.h.b16 %v92
    %v559 = vunpack.c.l.b16 %v93
    %v560 = vunpack.c.h.b16 %v93
    %v561 = vunpack.c.l.b16 %v94
    %v562 = vunpack.c.h.b16 %v94
    %v563 = vunpack.c.l.b16 %v95
    %v564 = vunpack.c.h.b16 %v95
    %v565 = vunpack.c.l.b16 %v96
    %v566 = vunpack.c.h.b16 %v96
    %v567 = vunpack.c.l.b16 %v97
    %v568 = vunpack.c.h.b16 %v97
    %v569 = vunpack.c.l.b16 %v98
    %v570 = vunpack.c.h.b16 %v98
    %v571 = vunpack.c.l.b16 %v99
    %v572 = vunpack.c.h.b16 %v99
    %v573 = vunpack.c.l.b16 %v100
    %v574 = vunpack.c.h.b16 %v100
    %v575 = vunpack.c.l.b16 %v101
    %v576 = vunpack.c.h.b16 %v101
    %v577 = vunpack.c.l.b16 %v102
    %v578 = vunpack.c.h.b16 %v102
    %v579 = vunpack.c.l.b16 %v103
    %v580 = vunpack.c.h.b16 %v103
    %v581 = vunpack.c.l.b16 %v104
    %v582 = vunpack.c.h.b16 %v104
    %v583 = vunpack.c.l.b16 %v105
    %v584 = vunpack.c.h.b16 %v105
    %v585 = vunpack.c.l.b16 %v106
    %v586 = vunpack.c.h.b16 %v106
    %v587 = vunpack.c.l.b16 %v107
    %v588 = vunpack.c.h.b16 %v107
    %v589 = vunpack.c.l.b16 %v108
    %v590 = vunpack.c.h.b16 %v108
    %v591 = vunpack.c.l.b16 %v109
    %v592 = vunpack.c.h.b16 %v109
    %v593 = vunpack.c.l.b16 %v110
    %v594 = vunpack.c.h.b16 %v110
    %v595 = vunpack.c.l.b16 %v111
    %v596 = vunpack.c.h.b16 %v111
    %v597 = vunpack.c.l.b16 %v112
    %v598 = vunpack.c.h.b16 %v112
    %v599 = vunpack.c.l.b16 %v113
    %v600 = vunpack.c.h.b16 %v113
    %v601 = vunpack.c.l.b16 %v114
    %v602 = vunpack.c.h.b16 %v114
    %v603 = vunpack.c.l.b16 %v115
    %v604 = vunpack.c.h.b16 %v115
    %v605 = vunpack.c.l.b16 %v116
    %v606 = vunpack.c.h.b16 %v116
    %v607 = vunpack.c.l.b16 %v117
    %v608 = vunpack.c.h.b16 %v117
    %v609 = vunpack.c.l.b16 %v118
    %v610 = vunpack.c.h.b16 %v118
    %v611 = vunpack.c.l.b16 %v119
    %v612 = vunpack.c.h.b16 %v119
    %v613 = vunpack.c.l.b16 %v120
    %v614 = vunpack.c.h.b16 %v120
    %v615 = vunpack.c.l.b16 %v121
    %v616 = vunpack.c.h.b16 %v121
    %v617 = vunpack.c.l.b16 %v122
    %v618 = vunpack.c.h.b16 %v122
    %v619 = vunpack.c.l.b16 %v123
    %v620 = vunpack.c.h.b16 %v123
    %v621 = vunpack.c.l.b16 %v124
    %v622 = vunpack.c.h.b16 %v124
    %v623 = vunpack.c.l.b16 %v125
    %v624 = vunpack.c.h.b16 %v125
    %v625 = vunpack.c.l.b16 %v126
    %v626 = vunpack.c.h.b16 %v126
    %v627 = vunpack.c.l.b16 %v127
    %v628 = vunpack.c.h.b16 %v127
    %v629 = vunpack.c.l.b16 %v128
    %v630 = vunpack.c.h.b16 %v128
    %v631 = vunpack.c.l.b16 %v129
    %v632 = vunpack.c.h.b16 %v129
    %v633 = vunpack.c.l.b16 %v130
    %v634 = vunpack.c.h.b16 %v130
    %v635 = vunpack.c.l.b16 %v131
    %v636 = vunpack.c.h.b16 %v131
    %v637 = vunpack.c.l.b16 %v132
    %v638 = vunpack.c.h.b16 %v132
    %v639 = vunpack.c.l.b16 %v133
    %v640 = vunpack.c.h.b16 %v133
    %v641 = vunpack.c.l.b16 %v134
    %v642 = vunpack.c.h.b16 %v134
    %v643 = vunpack.c.l.b16 %v135
    %v644 = vunpack.c.h.b16 %v135
    %v645 = vunpack.c.l.b16 %v136
    %v646 = vunpack.c.h.b16 %v136
    %v647 = vunpack.c.l.b16 %v137
    %v648 = vunpack.c.h.b16 %v137
    %v649 = vunpack.c.l.b16 %v138
    %v650 = vunpack.c.h.b16 %v138
    %v651 = vunpack.c.l.b16 %v139
    %v652 = vunpack.c.h.b16 %v139
    %v653 = vunpack.c.l.b16 %v140
    %v654 = vunpack.c.h.b16 %v140
    %v655 = vunpack.c.l.b16 %v141
    %v656 = vunpack.c.h.b16 %v141
    %v657 = vunpack.c.l.b16 %v142
    %v658 = vunpack.c.h.b16 %v142
    %v659 = vunpack.c.l.b16 %v143
    %v660 = vunpack.c.h.b16 %v143
    %v661 = vunpack.c.l.b16 %v144
    %v662 = vunpack.c.h.b16 %v144
    %v663 = vunpack.c.l.b16 %v145
    %v664 = vunpack.c.h.b16 %v145
    %v665 = vunpack.c.l.b16 %v146
    %v666 = vunpack.c.h.b16 %v146
    %v667 = vunpack.c.l.b16 %v147
    %v668 = vunpack.c.h.b16 %v147
    %v669 = vunpack.c.l.b16 %v148
    %v670 = vunpack.c.h.b16 %v148
    %v671 = vunpack.c.l.b16 %v149
    %v672 = vunpack.c.h.b16 %v149
    %v673 = vunpack.c.l.b16 %v150
    %v674 = vunpack.c.h.b16 %v150
    %v675 = vunpack.c.l.b16 %v151
    %v676 = vunpack.c.h.b16 %v151
    %v677 = vunpack.c.l.b16 %v152
    %v678 = vunpack.c.h.b16 %v152
    %v679 = vunpack.c.l.b16 %v153
    %v680 = vunpack.c.h.b16 %v153
    %v681 = vunpack.c.l.b16 %v154
    %v682 = vunpack.c.h.b16 %v154
    %v683 = vunpack.c.l.b16 %v155
    %v684 = vunpack.c.h.b16 %v155
    %v685 = vunpack.c.l.b16 %v156
    %v686 = vunpack.c.h.b16 %v156
    %v687 = vunpack.c.l.b16 %v157
    %v688 = vunpack.c.h.b16 %v157
    %v689 = vunpack.c.l.b16 %v158
    %v690 = vunpack.c.h.b16 %v158
    %v691 = vunpack.c.l.b16 %v159
    %v692 = vunpack.c.h.b16 %v159
    %v693 = vunpack.c.l.b16 %v160
    %v694 = vunpack.c.h.b16 %v160
    %v695 = vunpack.c.l.b16 %v161
    %v696 = vunpack.c.h.b16 %v161
    %v697 = vunpack.c.l.b16 %v162
    %v698 = vunpack.c.h.b16 %v162
    %v699 = vunpack.c.l.b16 %v163
    %v700 = vunpack.c.h.b16 %v163
    %v701 = vunpack.c.l.b16 %v164
    %v702 = vunpack.c.h.b16 %v164
    %v703 = vunpack.c.l.b16 %v165
    %v704 = vunpack.c.h.b16 %v165
    %v705 = vunpack.c.l.b16 %v166
    %v706 = vunpack.c.h.b16 %v166
    %v707 = vunpack.c.l.b16 %v167
    %v708 = vunpack.c.h.b16 %v167
    %v709 = vunpack.c.l.b16 %v168
    %v710 = vunpack.c.h.b16 %v168
    %v711 = vunpack.c.l.b16 %v169
    %v712 = vunpack.c.h.b16 %v169
    %v713 = vunpack.c.l.b16 %v170
    %v714 = vunpack.c.h.b16 %v170
    %v715 = vunpack.c.l.b16 %v171
    %v716 = vunpack.c.h.b16 %v171
    %v717 = vunpack.c.l.b16 %v172
    %v718 = vunpack.c.h.b16 %v172
    %v719 = vunpack.c.l.b16 %v173
    %v720 = vunpack.c.h.b16 %v173
    %v721 = vunpack.c.l.b16 %v174
    %v722 = vunpack.c.h.b16 %v174
    %v723 = vunpack.c.l.b16 %v175
    %v724 = vunpack.c.h.b16 %v175
    %v725 = vunpack.c.l.b16 %v176
    %v726 = vunpack.c.h.b16 %v176
    %v727 = vunpack.c.l.b16 %v177
    %v728 = vunpack.c.h.b16 %v177
    %v729 = vunpack.c.l.b16 %v178
    %v730 = vunpack.c.h.b16 %v178
    %v731 = vunpack.c.l.b16 %v179
    %v732 = vunpack.c.h.b16 %v179
    %v733 = vunpack.c.l.b16 %v180
    %v734 = vunpack.c.h.b16 %v180
    %v735 = vunpack.c.l.b16 %v181
    %v736 = vunpack.c.h.b16 %v181
    %v737 = vunpack.c.l.b16 %v182
    %v738 = vunpack.c.h.b16 %v182
    %v739 = vunpack.c.l.b16 %v183
    %v740 = vunpack.c.h.b16 %v183
    %v741 = vpack.c.b16 %v517, %v485
    %v742 = vpack.c.b16 %v518, %v486
    %v743 = vpack.c.b16 %v519, %v487
    %v744 = vpack.c.b16 %v520, %v488
    %v745 = vpack.c.b16 %v521, %v489
    %v746 = vpack.c.b16 %v522, %v490
    %v747 = vpack.c.b16 %v523, %v491
    %v748 = vpack.c.b16 %v524, %v492
    %v749 = vpack.c.b16 %v525, %v493
    %v750 = vpack.c.b16 %v526, %v494
    %v751 = vpack.c.b16 %v527, %v495
    %v752 = vpack.c.b16 %v528, %v496
    %v753 = vpack.c.b16 %v529, %v497
    %v754 = vpack.c.b16 %v530, %v498
    %v755 = vpack.c.b16 %v531, %v499
    %v756 = vpack.c.b16 %v532, %v500
    %v757 = vpack.c.b16 %v533, %v501
    %v758 = vpack.c.b16 %v534, %v502
    %v759 = vpack.c.b16 %v535, %v503
    %v760 = vpack.c.b16 %v536, %v504
    %v761 = vpack.c.b16 %v537, %v505
    %v762 = vpack.c.b16 %v538, %v506
    %v763 = vpack.c.b16 %v539, %v507
    %v764 = vpack.c.b16 %v540, %v508
    %v765 = vpack.c.b16 %v541, %v509
    %v766 = vpack.c.b16 %v542, %v510
    %v767 = vpack.c.b16 %v543, %v511
    %v768 = vpack.c.b16 %v544, %v512
    %v769 = vpack.c.b16 %v545, %v513
    %v770 = vpack.c.b16 %v546, %v514
    %v771 = vpack.c.b16 %v547, %v515
    %v772 = vpack.c.b16 %v548, %v516
    %v773 = vpack.c.b16 %v581, %v549
    %v774 = vpack.c.b16 %v582, %v550
    %v775 = vpack.c.b16 %v583, %v551
    %v776 = vpack.c.b16 %v584, %v552
    %v777 = vpack.c.b16 %v585, %v553
    %v778 = vpack.c.b16 %v586, %v554
    %v779 = vpack.c.b16 %v587, %v555
    %v780 = vpack.c.b16 %v588, %v556
    %v781 = vpack.c.b16 %v589, %v557
    %v782 = vpack.c.b16 %v590, %v558
    %v783 = vpack.c.b16 %v591, %v559
    %v784 = vpack.c.b16 %v592, %v560
    %v785 = vpack.c.b16 %v593, %v561
    %v786 = vpack.c.b16 %v594, %v562
    %v787 = vpack.c.b16 %v595, %v563
    %v788 = vpack.c.b16 %v596, %v564
    %v789 = vpack.c.b16 %v597, %v565
    %v790 = vpack.c.b16 %v598, %v566
    %v791 = vpack.c.b16 %v599, %v567
    %v792 = vpack.c.b16 %v600, %v568
    %v793 = vpack.c.b16 %v601, %v569
    %v794 = vpack.c.b16 %v602, %v570
    %v795 = vpack.c.b16 %v603, %v571
    %v796 = vpack.c.b16 %v604, %v572
    %v797 = vpack.c.b16 %v605, %v573
    %v798 = vpack.c.b16 %v606, %v574
    %v799 = vpack.c.b16 %v607, %v575
    %v800 = vpack.c.b16 %v608, %v576
    %v801 = vpack.c.b16 %v609, %v577
    %v802 = vpack.c.b16 %v610, %v578
    %v803 = vpack.c.b16 %v611, %v579
    %v804 = vpack.c.b16 %v612, %v580
    %v805 = vpack.c.b16 %v645, %v613
    %v806 = vpack.c.b16 %v646, %v614
    %v807 = vpack.c.b16 %v647, %v615
    %v808 = vpack.c.b16 %v648, %v616
    %v809 = vpack.c.b16 %v649, %v617
    %v810 = vpack.c.b16 %v650, %v618
    %v811 = vpack.c.b16 %v651, %v619
    %v812 = vpack.c.b16 %v652, %v620
    %v813 = vpack.c.b16 %v653, %v621
    %v814 = vpack.c.b16 %v654, %v622
    %v815 = vpack.c.b16 %v655, %v623
    %v816 = vpack.c.b16 %v656, %v624
    %v817 = vpack.c.b16 %v657, %v625
    %v818 = vpack.c.b16 %v658, %v626
    %v819 = vpack.c.b16 %v659, %v627
    %v820 = vpack.c.b16 %v660, %v628
    %v821 = vpack.c.b16 %v661, %v629
    %v822 = vpack.c.b16 %v662, %v630
    %v823 = vpack.c.b16 %v663, %v631
    %v824 = vpack.c.b16 %v664, %v632
    %v825 = vpack.c.b16 %v665, %v633
    %v826 = vpack.c.b16 %v666, %v634
    %v827 = vpack.c.b16 %v667, %v635
    %v828 = vpack.c.b16 %v668, %v636
    %v829 = vpack.c.b16 %v669, %v637
    %v830 = vpack.c.b16 %v670, %v638
    %v831 = vpack.c.b16 %v671, %v639
    %v832 = vpack.c.b16 %v672, %v640
    %v833 = vpack.c.b16 %v673, %v641
    %v834 = vpack.c.b16 %v674, %v642
    %v835 = vpack.c.b16 %v675, %v643
    %v836 = vpack.c.b16 %v676, %v644
    %v837 = vpack.c.b16 %v709, %v677
    %v838 = vpack.c.b16 %v710, %v678
    %v839 = vpack.c.b16 %v711, %v679
    %v840 = vpack.c.b16 %v712, %v680
    %v841 = vpack.c.b16 %v713, %v681
    %v842 = vpack.c.b16 %v714, %v682
    %v843 = vpack.c.b16 %v715, %v683
    %v844 = vpack.c.b16 %v716, %v684
    %v845 = vpack.c.b16 %v717, %v685
    %v846 = vpack.c.b16 %v718, %v686
    %v847 = vpack.c.b16 %v719, %v687
    %v848 = vpack.c.b16 %v720, %v688
    %v849 = vpack.c.b16 %v721, %v689
    %v850 = vpack.c.b16 %v722, %v690
    %v851 = vpack.c.b16 %v723, %v691
    %v852 = vpack.c.b16 %v724, %v692
    %v853 = vpack.c.b16 %v725, %v693
    %v854 = vpack.c.b16 %v726, %v694
    %v855 = vpack.c.b16 %v727, %v695
    %v856 = vpack.c.b16 %v728, %v696
    %v857 = vpack.c.b16 %v729, %v697
    %v858 = vpack.c.b16 %v730, %v698
    %v859 = vpack.c.b16 %v731, %v699
    %v860 = vpack.c.b16 %v732, %v700
    %v861 = vpack.c.b16 %v733, %v701
    %v862 = vpack.c.b16 %v734, %v702
    %v863 = vpack.c.b16 %v735, %v703
    %v864 = vpack.c.b16 %v736, %v704
    %v865 = vpack.c.b16 %v737, %v705
    %v866 = vpack.c.b16 %v738, %v706
    %v867 = vpack.c.b16 %v739, %v707
    %v868 = vpack.c.b16 %v740, %v708
    %vm997 = vcmask 523264
    %v999 = vsel %vm997, %v356, 0
    %1001 = vmatprep.subr.bf16.mxu0 0
    %1002 = vmatpush1.bf16.msra.mxu0 0
    %1003 = vmatprep.subr.bf16.mxu0 0
    %1004 = vmatpush1.bf16.msra.mxu0 0
    %1005 = vmatprep.subr.bf16.mxu0 0
    %1006 = vmatpush1.bf16.msra.mxu0 0
    %1007 = vmatprep.subr.bf16.mxu0 0
    %1008 = vmatpush1.bf16.msra.mxu0 0
    %1009 = vmatprep.subr.bf16.mxu0 %v838
    %1010 = vmatpush1.bf16.msra.mxu0 %v837
    %1011 = vmatprep.subr.bf16.mxu0 %v806
    %1012 = vmatpush1.bf16.msra.mxu0 %v805
    %1013 = vmatprep.subr.bf16.mxu0 %v774
    %1014 = vmatpush1.bf16.msra.mxu0 %v773
    %1015 = vmatprep.subr.bf16.mxu0 %v742
    %1016 = vmatpush1.bf16.msra.mxu0 %v741
    %1017 = vmatprep.subr.bf16.mxu0 0
    %1018 = vmatpush2.bf16.msra.mxu0 0
    %1019 = vmatprep.subr.bf16.mxu0 0
    %1020 = vmatpush2.bf16.msra.mxu0 0
    %1021 = vmatprep.subr.bf16.mxu0 0
    %1022 = vmatpush2.bf16.msra.mxu0 0
    %1023 = vmatprep.subr.bf16.mxu0 0
    %1024 = vmatpush2.bf16.msra.mxu0 0
    %1025 = vmatprep.subr.bf16.mxu0 0
    %1026 = vmatpush2.bf16.msra.mxu0 0
    %1027 = vmatprep.subr.bf16.mxu0 0
    %1028 = vmatpush2.bf16.msra.mxu0 0
    %1029 = vmatprep.subr.bf16.mxu0 0
    %1030 = vmatpush2.bf16.msra.mxu0 0
    %1031 = vmatprep.subr.bf16.mxu0 0
    %1032 = vmatpush2.bf16.msra.mxu0 0
    %1033 = vmatprep.mubr.bf16.mxu0 0
    %1034 = vmatmul.mubr.bf16.gmra.mxu0 %v999
    %v1035 = vpop.f32.mrf.mxu0
    %v1036 = vadd.f32 %v195, %v1035
    %v1037 = vpop.f32.mrf.mxu0
    %v1038 = vadd.f32 %v199, %v1037
    %v1039 = vpop.f32.mrf.mxu0
    %v1040 = vadd.f32 %v195, %v1039
    %v1041 = vpop.f32.mrf.mxu0
    %v1042 = vadd.f32 %v199, %v1041
    %1043 = vdwg.mxu0
    %1044 = vmatprep.subr.bf16.mxu0 0
    %1045 = vmatpush1.bf16.msra.mxu0 0
    %1046 = vmatprep.subr.bf16.mxu0 0
    %1047 = vmatpush1.bf16.msra.mxu0 0
    %1048 = vmatprep.subr.bf16.mxu0 0
    %1049 = vmatpush1.bf16.msra.mxu0 0
    %1050 = vmatprep.subr.bf16.mxu0 0
    %1051 = vmatpush1.bf16.msra.mxu0 0
    %1052 = vmatprep.subr.bf16.mxu0 %v840
    %1053 = vmatpush1.bf16.msra.mxu0 %v839
    %1054 = vmatprep.subr.bf16.mxu0 %v808
    %1055 = vmatpush1.bf16.msra.mxu0 %v807
    %1056 = vmatprep.subr.bf16.mxu0 %v776
    %1057 = vmatpush1.bf16.msra.mxu0 %v775
    %1058 = vmatprep.subr.bf16.mxu0 %v744
    %1059 = vmatpush1.bf16.msra.mxu0 %v743
    %1060 = vmatprep.subr.bf16.mxu0 0
    %1061 = vmatpush2.bf16.msra.mxu0 0
    %1062 = vmatprep.subr.bf16.mxu0 0
    %1063 = vmatpush2.bf16.msra.mxu0 0
    %1064 = vmatprep.subr.bf16.mxu0 0
    %1065 = vmatpush2.bf16.msra.mxu0 0
    %1066 = vmatprep.subr.bf16.mxu0 0
    %1067 = vmatpush2.bf16.msra.mxu0 0
    %1068 = vmatprep.subr.bf16.mxu0 0
    %1069 = vmatpush2.bf16.msra.mxu0 0
    %1070 = vmatprep.subr.bf16.mxu0 0
    %1071 = vmatpush2.bf16.msra.mxu0 0
    %1072 = vmatprep.subr.bf16.mxu0 0
    %1073 = vmatpush2.bf16.msra.mxu0 0
    %1074 = vmatprep.subr.bf16.mxu0 0
    %1075 = vmatpush2.bf16.msra.mxu0 0
    %1076 = vmatprep.mubr.bf16.mxu0 0
    %1077 = vmatmul.mubr.bf16.gmra.mxu0 %v999
    %v1078 = vpop.f32.mrf.mxu0
    %v1079 = vadd.f32 %v203, %v1078
    %v1080 = vpop.f32.mrf.mxu0
    %v1081 = vadd.f32 %v207, %v1080
    %v1082 = vpop.f32.mrf.mxu0
    %v1083 = vadd.f32 %v203, %v1082
    %v1084 = vpop.f32.mrf.mxu0
    %v1085 = vadd.f32 %v207, %v1084
    %1086 = vdwg.mxu0
    %1087 = vmatprep.subr.bf16.mxu0 0
    %1088 = vmatpush1.bf16.msra.mxu0 0
    %1089 = vmatprep.subr.bf16.mxu0 0
    %1090 = vmatpush1.bf16.msra.mxu0 0
    %1091 = vmatprep.subr.bf16.mxu0 0
    %1092 = vmatpush1.bf16.msra.mxu0 0
    %1093 = vmatprep.subr.bf16.mxu0 0
    %1094 = vmatpush1.bf16.msra.mxu0 0
    %1095 = vmatprep.subr.bf16.mxu0 %v842
    %1096 = vmatpush1.bf16.msra.mxu0 %v841
    %1097 = vmatprep.subr.bf16.mxu0 %v810
    %1098 = vmatpush1.bf16.msra.mxu0 %v809
    %1099 = vmatprep.subr.bf16.mxu0 %v778
    %1100 = vmatpush1.bf16.msra.mxu0 %v777
    %1101 = vmatprep.subr.bf16.mxu0 %v746
    %1102 = vmatpush1.bf16.msra.mxu0 %v745
    %1103 = vmatprep.subr.bf16.mxu0 0
    %1104 = vmatpush2.bf16.msra.mxu0 0
    %1105 = vmatprep.subr.bf16.mxu0 0
    %1106 = vmatpush2.bf16.msra.mxu0 0
    %1107 = vmatprep.subr.bf16.mxu0 0
    %1108 = vmatpush2.bf16.msra.mxu0 0
    %1109 = vmatprep.subr.bf16.mxu0 0
    %1110 = vmatpush2.bf16.msra.mxu0 0
    %1111 = vmatprep.subr.bf16.mxu0 0
    %1112 = vmatpush2.bf16.msra.mxu0 0
    %1113 = vmatprep.subr.bf16.mxu0 0
    %1114 = vmatpush2.bf16.msra.mxu0 0
    %1115 = vmatprep.subr.bf16.mxu0 0
    %1116 = vmatpush2.bf16.msra.mxu0 0
    %1117 = vmatprep.subr.bf16.mxu0 0
    %1118 = vmatpush2.bf16.msra.mxu0 0
    %1119 = vmatprep.mubr.bf16.mxu0 0
    %1120 = vmatmul.mubr.bf16.gmra.mxu0 %v999
    %v1121 = vpop.f32.mrf.mxu0
    %v1122 = vadd.f32 %v211, %v1121
    %v1123 = vpop.f32.mrf.mxu0
    %v1124 = vadd.f32 %v215, %v1123
    %v1125 = vpop.f32.mrf.mxu0
    %v1126 = vadd.f32 %v211, %v1125
    %v1127 = vpop.f32.mrf.mxu0
    %v1128 = vadd.f32 %v215, %v1127
    %1129 = vdwg.mxu0
    %1130 = vmatprep.subr.bf16.mxu0 0
    %1131 = vmatpush1.bf16.msra.mxu0 0
    %1132 = vmatprep.subr.bf16.mxu0 0
    %1133 = vmatpush1.bf16.msra.mxu0 0
    %1134 = vmatprep.subr.bf16.mxu0 0
    %1135 = vmatpush1.bf16.msra.mxu0 0
    %1136 = vmatprep.subr.bf16.mxu0 0
    %1137 = vmatpush1.bf16.msra.mxu0 0
    %1138 = vmatprep.subr.bf16.mxu0 %v844
    %1139 = vmatpush1.bf16.msra.mxu0 %v843
    %1140 = vmatprep.subr.bf16.mxu0 %v812
    %1141 = vmatpush1.bf16.msra.mxu0 %v811
    %1142 = vmatprep.subr.bf16.mxu0 %v780
    %1143 = vmatpush1.bf16.msra.mxu0 %v779
    %1144 = vmatprep.subr.bf16.mxu0 %v748
    %1145 = vmatpush1.bf16.msra.mxu0 %v747
    %1146 = vmatprep.subr.bf16.mxu0 0
    %1147 = vmatpush2.bf16.msra.mxu0 0
    %1148 = vmatprep.subr.bf16.mxu0 0
    %1149 = vmatpush2.bf16.msra.mxu0 0
    %1150 = vmatprep.subr.bf16.mxu0 0
    %1151 = vmatpush2.bf16.msra.mxu0 0
    %1152 = vmatprep.subr.bf16.mxu0 0
    %1153 = vmatpush2.bf16.msra.mxu0 0
    %1154 = vmatprep.subr.bf16.mxu0 0
    %1155 = vmatpush2.bf16.msra.mxu0 0
    %1156 = vmatprep.subr.bf16.mxu0 0
    %1157 = vmatpush2.bf16.msra.mxu0 0
    %1158 = vmatprep.subr.bf16.mxu0 0
    %1159 = vmatpush2.bf16.msra.mxu0 0
    %1160 = vmatprep.subr.bf16.mxu0 0
    %1161 = vmatpush2.bf16.msra.mxu0 0
    %1162 = vmatprep.mubr.bf16.mxu0 0
    %1163 = vmatmul.mubr.bf16.gmra.mxu0 %v999
    %v1164 = vpop.f32.mrf.mxu0
    %v1165 = vadd.f32 %v219, %v1164
    %v1166 = vpop.f32.mrf.mxu0
    %v1167 = vadd.f32 %v223, %v1166
    %v1168 = vpop.f32.mrf.mxu0
    %v1169 = vadd.f32 %v219, %v1168
    %v1170 = vpop.f32.mrf.mxu0
    %v1171 = vadd.f32 %v223, %v1170
    %1172 = vdwg.mxu0
    %1173 = vmatprep.subr.bf16.mxu0 0
    %1174 = vmatpush1.bf16.msra.mxu0 0
    %1175 = vmatprep.subr.bf16.mxu0 0
    %1176 = vmatpush1.bf16.msra.mxu0 0
    %1177 = vmatprep.subr.bf16.mxu0 0
    %1178 = vmatpush1.bf16.msra.mxu0 0
    %1179 = vmatprep.subr.bf16.mxu0 0
    %1180 = vmatpush1.bf16.msra.mxu0 0
    %1181 = vmatprep.subr.bf16.mxu0 %v846
    %1182 = vmatpush1.bf16.msra.mxu0 %v845
    %1183 = vmatprep.subr.bf16.mxu0 %v814
    %1184 = vmatpush1.bf16.msra.mxu0 %v813
    %1185 = vmatprep.subr.bf16.mxu0 %v782
    %1186 = vmatpush1.bf16.msra.mxu0 %v781
    %1187 = vmatprep.subr.bf16.mxu0 %v750
    %1188 = vmatpush1.bf16.msra.mxu0 %v749
    %1189 = vmatprep.subr.bf16.mxu0 0
    %1190 = vmatpush2.bf16.msra.mxu0 0
    %1191 = vmatprep.subr.bf16.mxu0 0
    %1192 = vmatpush2.bf16.msra.mxu0 0
    %1193 = vmatprep.subr.bf16.mxu0 0
    %1194 = vmatpush2.bf16.msra.mxu0 0
    %1195 = vmatprep.subr.bf16.mxu0 0
    %1196 = vmatpush2.bf16.msra.mxu0 0
    %1197 = vmatprep.subr.bf16.mxu0 0
    %1198 = vmatpush2.bf16.msra.mxu0 0
    %1199 = vmatprep.subr.bf16.mxu0 0
    %1200 = vmatpush2.bf16.msra.mxu0 0
    %1201 = vmatprep.subr.bf16.mxu0 0
    %1202 = vmatpush2.bf16.msra.mxu0 0
    %1203 = vmatprep.subr.bf16.mxu0 0
    %1204 = vmatpush2.bf16.msra.mxu0 0
    %1205 = vmatprep.mubr.bf16.mxu0 0
    %1206 = vmatmul.mubr.bf16.gmra.mxu0 %v999
    %v1207 = vpop.f32.mrf.mxu0
    %v1208 = vadd.f32 %v227, %v1207
    %v1209 = vpop.f32.mrf.mxu0
    %v1210 = vadd.f32 %v231, %v1209
    %v1211 = vpop.f32.mrf.mxu0
    %v1212 = vadd.f32 %v227, %v1211
    %v1213 = vpop.f32.mrf.mxu0
    %v1214 = vadd.f32 %v231, %v1213
    %1215 = vdwg.mxu0
    %1216 = vmatprep.subr.bf16.mxu0 0
    %1217 = vmatpush1.bf16.msra.mxu0 0
    %1218 = vmatprep.subr.bf16.mxu0 0
    %1219 = vmatpush1.bf16.msra.mxu0 0
    %1220 = vmatprep.subr.bf16.mxu0 0
    %1221 = vmatpush1.bf16.msra.mxu0 0
    %1222 = vmatprep.subr.bf16.mxu0 0
    %1223 = vmatpush1.bf16.msra.mxu0 0
    %1224 = vmatprep.subr.bf16.mxu0 %v848
    %1225 = vmatpush1.bf16.msra.mxu0 %v847
    %1226 = vmatprep.subr.bf16.mxu0 %v816
    %1227 = vmatpush1.bf16.msra.mxu0 %v815
    %1228 = vmatprep.subr.bf16.mxu0 %v784
    %1229 = vmatpush1.bf16.msra.mxu0 %v783
    %1230 = vmatprep.subr.bf16.mxu0 %v752
    %1231 = vmatpush1.bf16.msra.mxu0 %v751
    %1232 = vmatprep.subr.bf16.mxu0 0
    %1233 = vmatpush2.bf16.msra.mxu0 0
    %1234 = vmatprep.subr.bf16.mxu0 0
    %1235 = vmatpush2.bf16.msra.mxu0 0
    %1236 = vmatprep.subr.bf16.mxu0 0
    %1237 = vmatpush2.bf16.msra.mxu0 0
    %1238 = vmatprep.subr.bf16.mxu0 0
    %1239 = vmatpush2.bf16.msra.mxu0 0
    %1240 = vmatprep.subr.bf16.mxu0 0
    %1241 = vmatpush2.bf16.msra.mxu0 0
    %1242 = vmatprep.subr.bf16.mxu0 0
    %1243 = vmatpush2.bf16.msra.mxu0 0
    %1244 = vmatprep.subr.bf16.mxu0 0
    %1245 = vmatpush2.bf16.msra.mxu0 0
    %1246 = vmatprep.subr.bf16.mxu0 0
    %1247 = vmatpush2.bf16.msra.mxu0 0
    %1248 = vmatprep.mubr.bf16.mxu0 0
    %1249 = vmatmul.mubr.bf16.gmra.mxu0 %v999
    %v1250 = vpop.f32.mrf.mxu0
    %v1251 = vadd.f32 %v235, %v1250
    %v1252 = vpop.f32.mrf.mxu0
    %v1253 = vadd.f32 %v239, %v1252
    %v1254 = vpop.f32.mrf.mxu0
    %v1255 = vadd.f32 %v235, %v1254
    %v1256 = vpop.f32.mrf.mxu0
    %v1257 = vadd.f32 %v239, %v1256
    %1258 = vdwg.mxu0
    %1259 = vmatprep.subr.bf16.mxu0 0
    %1260 = vmatpush1.bf16.msra.mxu0 0
    %1261 = vmatprep.subr.bf16.mxu0 0
    %1262 = vmatpush1.bf16.msra.mxu0 0
    %1263 = vmatprep.subr.bf16.mxu0 0
    %1264 = vmatpush1.bf16.msra.mxu0 0
    %1265 = vmatprep.subr.bf16.mxu0 0
    %1266 = vmatpush1.bf16.msra.mxu0 0
    %1267 = vmatprep.subr.bf16.mxu0 %v850
    %1268 = vmatpush1.bf16.msra.mxu0 %v849
    %1269 = vmatprep.subr.bf16.mxu0 %v818
    %1270 = vmatpush1.bf16.msra.mxu0 %v817
    %1271 = vmatprep.subr.bf16.mxu0 %v786
    %1272 = vmatpush1.bf16.msra.mxu0 %v785
    %1273 = vmatprep.subr.bf16.mxu0 %v754
    %1274 = vmatpush1.bf16.msra.mxu0 %v753
    %1275 = vmatprep.subr.bf16.mxu0 0
    %1276 = vmatpush2.bf16.msra.mxu0 0
    %1277 = vmatprep.subr.bf16.mxu0 0
    %1278 = vmatpush2.bf16.msra.mxu0 0
    %1279 = vmatprep.subr.bf16.mxu0 0
    %1280 = vmatpush2.bf16.msra.mxu0 0
    %1281 = vmatprep.subr.bf16.mxu0 0
    %1282 = vmatpush2.bf16.msra.mxu0 0
    %1283 = vmatprep.subr.bf16.mxu0 0
    %1284 = vmatpush2.bf16.msra.mxu0 0
    %1285 = vmatprep.subr.bf16.mxu0 0
    %1286 = vmatpush2.bf16.msra.mxu0 0
    %1287 = vmatprep.subr.bf16.mxu0 0
    %1288 = vmatpush2.bf16.msra.mxu0 0
    %1289 = vmatprep.subr.bf16.mxu0 0
    %1290 = vmatpush2.bf16.msra.mxu0 0
    %1291 = vmatprep.mubr.bf16.mxu0 0
    %1292 = vmatmul.mubr.bf16.gmra.mxu0 %v999
    %v1293 = vpop.f32.mrf.mxu0
    %v1294 = vadd.f32 %v243, %v1293
    %v1295 = vpop.f32.mrf.mxu0
    %v1296 = vadd.f32 %v247, %v1295
    %v1297 = vpop.f32.mrf.mxu0
    %v1298 = vadd.f32 %v243, %v1297
    %v1299 = vpop.f32.mrf.mxu0
    %v1300 = vadd.f32 %v247, %v1299
    %1301 = vdwg.mxu0
    %1302 = vmatprep.subr.bf16.mxu0 0
    %1303 = vmatpush1.bf16.msra.mxu0 0
    %1304 = vmatprep.subr.bf16.mxu0 0
    %1305 = vmatpush1.bf16.msra.mxu0 0
    %1306 = vmatprep.subr.bf16.mxu0 0
    %1307 = vmatpush1.bf16.msra.mxu0 0
    %1308 = vmatprep.subr.bf16.mxu0 0
    %1309 = vmatpush1.bf16.msra.mxu0 0
    %1310 = vmatprep.subr.bf16.mxu0 %v852
    %1311 = vmatpush1.bf16.msra.mxu0 %v851
    %1312 = vmatprep.subr.bf16.mxu0 %v820
    %1313 = vmatpush1.bf16.msra.mxu0 %v819
    %1314 = vmatprep.subr.bf16.mxu0 %v788
    %1315 = vmatpush1.bf16.msra.mxu0 %v787
    %1316 = vmatprep.subr.bf16.mxu0 %v756
    %1317 = vmatpush1.bf16.msra.mxu0 %v755
    %1318 = vmatprep.subr.bf16.mxu0 0
    %1319 = vmatpush2.bf16.msra.mxu0 0
    %1320 = vmatprep.subr.bf16.mxu0 0
    %1321 = vmatpush2.bf16.msra.mxu0 0
    %1322 = vmatprep.subr.bf16.mxu0 0
    %1323 = vmatpush2.bf16.msra.mxu0 0
    %1324 = vmatprep.subr.bf16.mxu0 0
    %1325 = vmatpush2.bf16.msra.mxu0 0
    %1326 = vmatprep.subr.bf16.mxu0 0
    %1327 = vmatpush2.bf16.msra.mxu0 0
    %1328 = vmatprep.subr.bf16.mxu0 0
    %1329 = vmatpush2.bf16.msra.mxu0 0
    %1330 = vmatprep.subr.bf16.mxu0 0
    %1331 = vmatpush2.bf16.msra.mxu0 0
    %1332 = vmatprep.subr.bf16.mxu0 0
    %1333 = vmatpush2.bf16.msra.mxu0 0
    %1334 = vmatprep.mubr.bf16.mxu0 0
    %1335 = vmatmul.mubr.bf16.gmra.mxu0 %v999
    %v1336 = vpop.f32.mrf.mxu0
    %v1337 = vadd.f32 %v251, %v1336
    %v1338 = vpop.f32.mrf.mxu0
    %v1339 = vadd.f32 %v255, %v1338
    %v1340 = vpop.f32.mrf.mxu0
    %v1341 = vadd.f32 %v251, %v1340
    %v1342 = vpop.f32.mrf.mxu0
    %v1343 = vadd.f32 %v255, %v1342
    %1344 = vdwg.mxu0
    %1345 = vmatprep.subr.bf16.mxu0 0
    %1346 = vmatpush1.bf16.msra.mxu0 0
    %1347 = vmatprep.subr.bf16.mxu0 0
    %1348 = vmatpush1.bf16.msra.mxu0 0
    %1349 = vmatprep.subr.bf16.mxu0 0
    %1350 = vmatpush1.bf16.msra.mxu0 0
    %1351 = vmatprep.subr.bf16.mxu0 0
    %1352 = vmatpush1.bf16.msra.mxu0 0
    %1353 = vmatprep.subr.bf16.mxu0 %v854
    %1354 = vmatpush1.bf16.msra.mxu0 %v853
    %1355 = vmatprep.subr.bf16.mxu0 %v822
    %1356 = vmatpush1.bf16.msra.mxu0 %v821
    %1357 = vmatprep.subr.bf16.mxu0 %v790
    %1358 = vmatpush1.bf16.msra.mxu0 %v789
    %1359 = vmatprep.subr.bf16.mxu0 %v758
    %1360 = vmatpush1.bf16.msra.mxu0 %v757
    %1361 = vmatprep.subr.bf16.mxu0 0
    %1362 = vmatpush2.bf16.msra.mxu0 0
    %1363 = vmatprep.subr.bf16.mxu0 0
    %1364 = vmatpush2.bf16.msra.mxu0 0
    %1365 = vmatprep.subr.bf16.mxu0 0
    %1366 = vmatpush2.bf16.msra.mxu0 0
    %1367 = vmatprep.subr.bf16.mxu0 0
    %1368 = vmatpush2.bf16.msra.mxu0 0
    %1369 = vmatprep.subr.bf16.mxu0 0
    %1370 = vmatpush2.bf16.msra.mxu0 0
    %1371 = vmatprep.subr.bf16.mxu0 0
    %1372 = vmatpush2.bf16.msra.mxu0 0
    %1373 = vmatprep.subr.bf16.mxu0 0
    %1374 = vmatpush2.bf16.msra.mxu0 0
    %1375 = vmatprep.subr.bf16.mxu0 0
    %1376 = vmatpush2.bf16.msra.mxu0 0
    %1377 = vmatprep.mubr.bf16.mxu0 0
    %1378 = vmatmul.mubr.bf16.gmra.mxu0 %v999
    %v1379 = vpop.f32.mrf.mxu0
    %v1380 = vadd.f32 %v259, %v1379
    %v1381 = vpop.f32.mrf.mxu0
    %v1382 = vadd.f32 %v263, %v1381
    %v1383 = vpop.f32.mrf.mxu0
    %v1384 = vadd.f32 %v259, %v1383
    %v1385 = vpop.f32.mrf.mxu0
    %v1386 = vadd.f32 %v263, %v1385
    %1387 = vdwg.mxu0
    %1388 = vmatprep.subr.bf16.mxu0 0
    %1389 = vmatpush1.bf16.msra.mxu0 0
    %1390 = vmatprep.subr.bf16.mxu0 0
    %1391 = vmatpush1.bf16.msra.mxu0 0
    %1392 = vmatprep.subr.bf16.mxu0 0
    %1393 = vmatpush1.bf16.msra.mxu0 0
    %1394 = vmatprep.subr.bf16.mxu0 0
    %1395 = vmatpush1.bf16.msra.mxu0 0
    %1396 = vmatprep.subr.bf16.mxu0 %v856
    %1397 = vmatpush1.bf16.msra.mxu0 %v855
    %1398 = vmatprep.subr.bf16.mxu0 %v824
    %1399 = vmatpush1.bf16.msra.mxu0 %v823
    %1400 = vmatprep.subr.bf16.mxu0 %v792
    %1401 = vmatpush1.bf16.msra.mxu0 %v791
    %1402 = vmatprep.subr.bf16.mxu0 %v760
    %1403 = vmatpush1.bf16.msra.mxu0 %v759
    %1404 = vmatprep.subr.bf16.mxu0 0
    %1405 = vmatpush2.bf16.msra.mxu0 0
    %1406 = vmatprep.subr.bf16.mxu0 0
    %1407 = vmatpush2.bf16.msra.mxu0 0
    %1408 = vmatprep.subr.bf16.mxu0 0
    %1409 = vmatpush2.bf16.msra.mxu0 0
    %1410 = vmatprep.subr.bf16.mxu0 0
    %1411 = vmatpush2.bf16.msra.mxu0 0
    %1412 = vmatprep.subr.bf16.mxu0 0
    %1413 = vmatpush2.bf16.msra.mxu0 0
    %1414 = vmatprep.subr.bf16.mxu0 0
    %1415 = vmatpush2.bf16.msra.mxu0 0
    %1416 = vmatprep.subr.bf16.mxu0 0
    %1417 = vmatpush2.bf16.msra.mxu0 0
    %1418 = vmatprep.subr.bf16.mxu0 0
    %1419 = vmatpush2.bf16.msra.mxu0 0
    %1420 = vmatprep.mubr.bf16.mxu0 0
    %1421 = vmatmul.mubr.bf16.gmra.mxu0 %v999
    %v1422 = vpop.f32.mrf.mxu0
    %v1423 = vadd.f32 %v267, %v1422
    %v1424 = vpop.f32.mrf.mxu0
    %v1425 = vadd.f32 %v271, %v1424
    %v1426 = vpop.f32.mrf.mxu0
    %v1427 = vadd.f32 %v267, %v1426
    %v1428 = vpop.f32.mrf.mxu0
    %v1429 = vadd.f32 %v271, %v1428
    %1430 = vdwg.mxu0
    %1431 = vmatprep.subr.bf16.mxu0 0
    %1432 = vmatpush1.bf16.msra.mxu0 0
    %1433 = vmatprep.subr.bf16.mxu0 0
    %1434 = vmatpush1.bf16.msra.mxu0 0
    %1435 = vmatprep.subr.bf16.mxu0 0
    %1436 = vmatpush1.bf16.msra.mxu0 0
    %1437 = vmatprep.subr.bf16.mxu0 0
    %1438 = vmatpush1.bf16.msra.mxu0 0
    %1439 = vmatprep.subr.bf16.mxu0 %v858
    %1440 = vmatpush1.bf16.msra.mxu0 %v857
    %1441 = vmatprep.subr.bf16.mxu0 %v826
    %1442 = vmatpush1.bf16.msra.mxu0 %v825
    %1443 = vmatprep.subr.bf16.mxu0 %v794
    %1444 = vmatpush1.bf16.msra.mxu0 %v793
    %1445 = vmatprep.subr.bf16.mxu0 %v762
    %1446 = vmatpush1.bf16.msra.mxu0 %v761
    %1447 = vmatprep.subr.bf16.mxu0 0
    %1448 = vmatpush2.bf16.msra.mxu0 0
    %1449 = vmatprep.subr.bf16.mxu0 0
    %1450 = vmatpush2.bf16.msra.mxu0 0
    %1451 = vmatprep.subr.bf16.mxu0 0
    %1452 = vmatpush2.bf16.msra.mxu0 0
    %1453 = vmatprep.subr.bf16.mxu0 0
    %1454 = vmatpush2.bf16.msra.mxu0 0
    %1455 = vmatprep.subr.bf16.mxu0 0
    %1456 = vmatpush2.bf16.msra.mxu0 0
    %1457 = vmatprep.subr.bf16.mxu0 0
    %1458 = vmatpush2.bf16.msra.mxu0 0
    %1459 = vmatprep.subr.bf16.mxu0 0
    %1460 = vmatpush2.bf16.msra.mxu0 0
    %1461 = vmatprep.subr.bf16.mxu0 0
    %1462 = vmatpush2.bf16.msra.mxu0 0
    %1463 = vmatprep.mubr.bf16.mxu0 0
    %1464 = vmatmul.mubr.bf16.gmra.mxu0 %v999
    %v1465 = vpop.f32.mrf.mxu0
    %v1466 = vadd.f32 %v275, %v1465
    %v1467 = vpop.f32.mrf.mxu0
    %v1468 = vadd.f32 %v279, %v1467
    %v1469 = vpop.f32.mrf.mxu0
    %v1470 = vadd.f32 %v275, %v1469
    %v1471 = vpop.f32.mrf.mxu0
    %v1472 = vadd.f32 %v279, %v1471
    %1473 = vdwg.mxu0
    %1474 = vmatprep.subr.bf16.mxu0 0
    %1475 = vmatpush1.bf16.msra.mxu0 0
    %1476 = vmatprep.subr.bf16.mxu0 0
    %1477 = vmatpush1.bf16.msra.mxu0 0
    %1478 = vmatprep.subr.bf16.mxu0 0
    %1479 = vmatpush1.bf16.msra.mxu0 0
    %1480 = vmatprep.subr.bf16.mxu0 0
    %1481 = vmatpush1.bf16.msra.mxu0 0
    %1482 = vmatprep.subr.bf16.mxu0 %v860
    %1483 = vmatpush1.bf16.msra.mxu0 %v859
    %1484 = vmatprep.subr.bf16.mxu0 %v828
    %1485 = vmatpush1.bf16.msra.mxu0 %v827
    %1486 = vmatprep.subr.bf16.mxu0 %v796
    %1487 = vmatpush1.bf16.msra.mxu0 %v795
    %1488 = vmatprep.subr.bf16.mxu0 %v764
    %1489 = vmatpush1.bf16.msra.mxu0 %v763
    %1490 = vmatprep.subr.bf16.mxu0 0
    %1491 = vmatpush2.bf16.msra.mxu0 0
    %1492 = vmatprep.subr.bf16.mxu0 0
    %1493 = vmatpush2.bf16.msra.mxu0 0
    %1494 = vmatprep.subr.bf16.mxu0 0
    %1495 = vmatpush2.bf16.msra.mxu0 0
    %1496 = vmatprep.subr.bf16.mxu0 0
    %1497 = vmatpush2.bf16.msra.mxu0 0
    %1498 = vmatprep.subr.bf16.mxu0 0
    %1499 = vmatpush2.bf16.msra.mxu0 0
    %1500 = vmatprep.subr.bf16.mxu0 0
    %1501 = vmatpush2.bf16.msra.mxu0 0
    %1502 = vmatprep.subr.bf16.mxu0 0
    %1503 = vmatpush2.bf16.msra.mxu0 0
    %1504 = vmatprep.subr.bf16.mxu0 0
    %1505 = vmatpush2.bf16.msra.mxu0 0
    %1506 = vmatprep.mubr.bf16.mxu0 0
    %1507 = vmatmul.mubr.bf16.gmra.mxu0 %v999
    %v1508 = vpop.f32.mrf.mxu0
    %v1509 = vadd.f32 %v283, %v1508
    %v1510 = vpop.f32.mrf.mxu0
    %v1511 = vadd.f32 %v287, %v1510
    %v1512 = vpop.f32.mrf.mxu0
    %v1513 = vadd.f32 %v283, %v1512
    %v1514 = vpop.f32.mrf.mxu0
    %v1515 = vadd.f32 %v287, %v1514
    %1516 = vdwg.mxu0
    %1517 = vmatprep.subr.bf16.mxu0 0
    %1518 = vmatpush1.bf16.msra.mxu0 0
    %1519 = vmatprep.subr.bf16.mxu0 0
    %1520 = vmatpush1.bf16.msra.mxu0 0
    %1521 = vmatprep.subr.bf16.mxu0 0
    %1522 = vmatpush1.bf16.msra.mxu0 0
    %1523 = vmatprep.subr.bf16.mxu0 0
    %1524 = vmatpush1.bf16.msra.mxu0 0
    %1525 = vmatprep.subr.bf16.mxu0 %v862
    %1526 = vmatpush1.bf16.msra.mxu0 %v861
    %1527 = vmatprep.subr.bf16.mxu0 %v830
    %1528 = vmatpush1.bf16.msra.mxu0 %v829
    %1529 = vmatprep.subr.bf16.mxu0 %v798
    %1530 = vmatpush1.bf16.msra.mxu0 %v797
    %1531 = vmatprep.subr.bf16.mxu0 %v766
    %1532 = vmatpush1.bf16.msra.mxu0 %v765
    %1533 = vmatprep.subr.bf16.mxu0 0
    %1534 = vmatpush2.bf16.msra.mxu0 0
    %1535 = vmatprep.subr.bf16.mxu0 0
    %1536 = vmatpush2.bf16.msra.mxu0 0
    %1537 = vmatprep.subr.bf16.mxu0 0
    %1538 = vmatpush2.bf16.msra.mxu0 0
    %1539 = vmatprep.subr.bf16.mxu0 0
    %1540 = vmatpush2.bf16.msra.mxu0 0
    %1541 = vmatprep.subr.bf16.mxu0 0
    %1542 = vmatpush2.bf16.msra.mxu0 0
    %1543 = vmatprep.subr.bf16.mxu0 0
    %1544 = vmatpush2.bf16.msra.mxu0 0
    %1545 = vmatprep.subr.bf16.mxu0 0
    %1546 = vmatpush2.bf16.msra.mxu0 0
    %1547 = vmatprep.subr.bf16.mxu0 0
    %1548 = vmatpush2.bf16.msra.mxu0 0
    %1549 = vmatprep.mubr.bf16.mxu0 0
    %1550 = vmatmul.mubr.bf16.gmra.mxu0 %v999
    %v1551 = vpop.f32.mrf.mxu0
    %v1552 = vadd.f32 %v291, %v1551
    %v1553 = vpop.f32.mrf.mxu0
    %v1554 = vadd.f32 %v295, %v1553
    %v1555 = vpop.f32.mrf.mxu0
    %v1556 = vadd.f32 %v291, %v1555
    %v1557 = vpop.f32.mrf.mxu0
    %v1558 = vadd.f32 %v295, %v1557
    %1559 = vdwg.mxu0
    %1560 = vmatprep.subr.bf16.mxu0 0
    %1561 = vmatpush1.bf16.msra.mxu0 0
    %1562 = vmatprep.subr.bf16.mxu0 0
    %1563 = vmatpush1.bf16.msra.mxu0 0
    %1564 = vmatprep.subr.bf16.mxu0 0
    %1565 = vmatpush1.bf16.msra.mxu0 0
    %1566 = vmatprep.subr.bf16.mxu0 0
    %1567 = vmatpush1.bf16.msra.mxu0 0
    %1568 = vmatprep.subr.bf16.mxu0 %v864
    %1569 = vmatpush1.bf16.msra.mxu0 %v863
    %1570 = vmatprep.subr.bf16.mxu0 %v832
    %1571 = vmatpush1.bf16.msra.mxu0 %v831
    %1572 = vmatprep.subr.bf16.mxu0 %v800
    %1573 = vmatpush1.bf16.msra.mxu0 %v799
    %1574 = vmatprep.subr.bf16.mxu0 %v768
    %1575 = vmatpush1.bf16.msra.mxu0 %v767
    %1576 = vmatprep.subr.bf16.mxu0 0
    %1577 = vmatpush2.bf16.msra.mxu0 0
    %1578 = vmatprep.subr.bf16.mxu0 0
    %1579 = vmatpush2.bf16.msra.mxu0 0
    %1580 = vmatprep.subr.bf16.mxu0 0
    %1581 = vmatpush2.bf16.msra.mxu0 0
    %1582 = vmatprep.subr.bf16.mxu0 0
    %1583 = vmatpush2.bf16.msra.mxu0 0
    %1584 = vmatprep.subr.bf16.mxu0 0
    %1585 = vmatpush2.bf16.msra.mxu0 0
    %1586 = vmatprep.subr.bf16.mxu0 0
    %1587 = vmatpush2.bf16.msra.mxu0 0
    %1588 = vmatprep.subr.bf16.mxu0 0
    %1589 = vmatpush2.bf16.msra.mxu0 0
    %1590 = vmatprep.subr.bf16.mxu0 0
    %1591 = vmatpush2.bf16.msra.mxu0 0
    %1592 = vmatprep.mubr.bf16.mxu0 0
    %1593 = vmatmul.mubr.bf16.gmra.mxu0 %v999
    %v1594 = vpop.f32.mrf.mxu0
    %v1595 = vadd.f32 %v299, %v1594
    %v1596 = vpop.f32.mrf.mxu0
    %v1597 = vadd.f32 %v303, %v1596
    %v1598 = vpop.f32.mrf.mxu0
    %v1599 = vadd.f32 %v299, %v1598
    %v1600 = vpop.f32.mrf.mxu0
    %v1601 = vadd.f32 %v303, %v1600
    %1602 = vdwg.mxu0
    %1603 = vmatprep.subr.bf16.mxu0 0
    %1604 = vmatpush1.bf16.msra.mxu0 0
    %1605 = vmatprep.subr.bf16.mxu0 0
    %1606 = vmatpush1.bf16.msra.mxu0 0
    %1607 = vmatprep.subr.bf16.mxu0 0
    %1608 = vmatpush1.bf16.msra.mxu0 0
    %1609 = vmatprep.subr.bf16.mxu0 0
    %1610 = vmatpush1.bf16.msra.mxu0 0
    %1611 = vmatprep.subr.bf16.mxu0 %v866
    %1612 = vmatpush1.bf16.msra.mxu0 %v865
    %1613 = vmatprep.subr.bf16.mxu0 %v834
    %1614 = vmatpush1.bf16.msra.mxu0 %v833
    %1615 = vmatprep.subr.bf16.mxu0 %v802
    %1616 = vmatpush1.bf16.msra.mxu0 %v801
    %1617 = vmatprep.subr.bf16.mxu0 %v770
    %1618 = vmatpush1.bf16.msra.mxu0 %v769
    %1619 = vmatprep.subr.bf16.mxu0 0
    %1620 = vmatpush2.bf16.msra.mxu0 0
    %1621 = vmatprep.subr.bf16.mxu0 0
    %1622 = vmatpush2.bf16.msra.mxu0 0
    %1623 = vmatprep.subr.bf16.mxu0 0
    %1624 = vmatpush2.bf16.msra.mxu0 0
    %1625 = vmatprep.subr.bf16.mxu0 0
    %1626 = vmatpush2.bf16.msra.mxu0 0
    %1627 = vmatprep.subr.bf16.mxu0 0
    %1628 = vmatpush2.bf16.msra.mxu0 0
    %1629 = vmatprep.subr.bf16.mxu0 0
    %1630 = vmatpush2.bf16.msra.mxu0 0
    %1631 = vmatprep.subr.bf16.mxu0 0
    %1632 = vmatpush2.bf16.msra.mxu0 0
    %1633 = vmatprep.subr.bf16.mxu0 0
    %1634 = vmatpush2.bf16.msra.mxu0 0
    %1635 = vmatprep.mubr.bf16.mxu0 0
    %1636 = vmatmul.mubr.bf16.gmra.mxu0 %v999
    %v1637 = vpop.f32.mrf.mxu0
    %v1638 = vadd.f32 %v307, %v1637
    %v1639 = vpop.f32.mrf.mxu0
    %v1640 = vadd.f32 %v311, %v1639
    %v1641 = vpop.f32.mrf.mxu0
    %v1642 = vadd.f32 %v307, %v1641
    %v1643 = vpop.f32.mrf.mxu0
    %v1644 = vadd.f32 %v311, %v1643
    %1645 = vdwg.mxu0
    %1646 = vmatprep.subr.bf16.mxu0 0
    %1647 = vmatpush1.bf16.msra.mxu0 0
    %1648 = vmatprep.subr.bf16.mxu0 0
    %1649 = vmatpush1.bf16.msra.mxu0 0
    %1650 = vmatprep.subr.bf16.mxu0 0
    %1651 = vmatpush1.bf16.msra.mxu0 0
    %1652 = vmatprep.subr.bf16.mxu0 0
    %1653 = vmatpush1.bf16.msra.mxu0 0
    %1654 = vmatprep.subr.bf16.mxu0 %v868
    %1655 = vmatpush1.bf16.msra.mxu0 %v867
    %1656 = vmatprep.subr.bf16.mxu0 %v836
    %1657 = vmatpush1.bf16.msra.mxu0 %v835
    %1658 = vmatprep.subr.bf16.mxu0 %v804
    %1659 = vmatpush1.bf16.msra.mxu0 %v803
    %1660 = vmatprep.subr.bf16.mxu0 %v772
    %1661 = vmatpush1.bf16.msra.mxu0 %v771
    %1662 = vmatprep.subr.bf16.mxu0 0
    %1663 = vmatpush2.bf16.msra.mxu0 0
    %1664 = vmatprep.subr.bf16.mxu0 0
    %1665 = vmatpush2.bf16.msra.mxu0 0
    %1666 = vmatprep.subr.bf16.mxu0 0
    %1667 = vmatpush2.bf16.msra.mxu0 0
    %1668 = vmatprep.subr.bf16.mxu0 0
    %1669 = vmatpush2.bf16.msra.mxu0 0
    %1670 = vmatprep.subr.bf16.mxu0 0
    %1671 = vmatpush2.bf16.msra.mxu0 0
    %1672 = vmatprep.subr.bf16.mxu0 0
    %1673 = vmatpush2.bf16.msra.mxu0 0
    %1674 = vmatprep.subr.bf16.mxu0 0
    %1675 = vmatpush2.bf16.msra.mxu0 0
    %1676 = vmatprep.subr.bf16.mxu0 0
    %1677 = vmatpush2.bf16.msra.mxu0 0
    %1678 = vmatprep.mubr.bf16.mxu0 0
    %1679 = vmatmul.mubr.bf16.gmra.mxu0 %v999
    %v1680 = vpop.f32.mrf.mxu0
    %v1681 = vadd.f32 %v315, %v1680
    %v1682 = vpop.f32.mrf.mxu0
    %v1683 = vadd.f32 %v319, %v1682
    %v1684 = vpop.f32.mrf.mxu0
    %v1685 = vadd.f32 %v315, %v1684
    %v1686 = vpop.f32.mrf.mxu0
    %v1687 = vadd.f32 %v319, %v1686
    %1688 = vdwg.mxu0
    %v1689 = vmul.f32 %v1036, %v1040
    %v1690 = vmul.f32 %v1038, %v1042
    %v1691 = vmul.f32 %v1079, %v1083
    %v1692 = vmul.f32 %v1081, %v1085
    %v1693 = vmul.f32 %v1122, %v1126
    %v1694 = vmul.f32 %v1124, %v1128
    %v1695 = vmul.f32 %v1165, %v1169
    %v1696 = vmul.f32 %v1167, %v1171
    %v1697 = vmul.f32 %v1208, %v1212
    %v1698 = vmul.f32 %v1210, %v1214
    %v1699 = vmul.f32 %v1251, %v1255
    %v1700 = vmul.f32 %v1253, %v1257
    %v1701 = vmul.f32 %v1294, %v1298
    %v1702 = vmul.f32 %v1296, %v1300
    %v1703 = vmul.f32 %v1337, %v1341
    %v1704 = vmul.f32 %v1339, %v1343
    %v1705 = vmul.f32 %v1380, %v1384
    %v1706 = vmul.f32 %v1382, %v1386
    %v1707 = vmul.f32 %v1423, %v1427
    %v1708 = vmul.f32 %v1425, %v1429
    %v1709 = vmul.f32 %v1466, %v1470
    %v1710 = vmul.f32 %v1468, %v1472
    %v1711 = vmul.f32 %v1509, %v1513
    %v1712 = vmul.f32 %v1511, %v1515
    %v1713 = vmul.f32 %v1552, %v1556
    %v1714 = vmul.f32 %v1554, %v1558
    %v1715 = vmul.f32 %v1595, %v1599
    %v1716 = vmul.f32 %v1597, %v1601
    %v1717 = vmul.f32 %v1638, %v1642
    %v1718 = vmul.f32 %v1640, %v1644
    %v1719 = vmul.f32 %v1681, %v1685
    %v1720 = vmul.f32 %v1683, %v1687
    %v1721 = vadd.f32 %v1689, %v1690
    %v1722 = vadd.f32 %v1721, %v1691
    %v1723 = vadd.f32 %v1722, %v1692
    %v1724 = vadd.f32 %v1723, %v1693
    %v1725 = vadd.f32 %v1724, %v1694
    %v1726 = vadd.f32 %v1725, %v1695
    %v1727 = vadd.f32 %v1726, %v1696
    %v1728 = vadd.f32 %v1727, %v1697
    %v1729 = vadd.f32 %v1728, %v1698
    %v1730 = vadd.f32 %v1729, %v1699
    %v1731 = vadd.f32 %v1730, %v1700
    %v1732 = vadd.f32 %v1731, %v1701
    %v1733 = vadd.f32 %v1732, %v1702
    %v1734 = vadd.f32 %v1733, %v1703
    %v1735 = vadd.f32 %v1734, %v1704
    %v1736 = vadd.f32 %v1735, %v1705
    %v1737 = vadd.f32 %v1736, %v1706
    %v1738 = vadd.f32 %v1737, %v1707
    %v1739 = vadd.f32 %v1738, %v1708
    %v1740 = vadd.f32 %v1739, %v1709
    %v1741 = vadd.f32 %v1740, %v1710
    %v1742 = vadd.f32 %v1741, %v1711
    %v1743 = vadd.f32 %v1742, %v1712
    %v1744 = vadd.f32 %v1743, %v1713
    %v1745 = vadd.f32 %v1744, %v1714
    %v1746 = vadd.f32 %v1745, %v1715
    %v1747 = vadd.f32 %v1746, %v1716
    %v1748 = vadd.f32 %v1747, %v1717
    %v1749 = vadd.f32 %v1748, %v1718
    %v1750 = vadd.f32 %v1749, %v1719
    %v1751 = vadd.f32 %v1750, %v1720
    %1752 = vadd.xlane.f32.xlu0 %v1751
    %v1753 = vpop.xlane.xlu0 %1752
    %vm1754 = vcmask 7168
    %1755 = vst.msk [vmem:[%s3] sm:$0xff] %vm1754, %v1753
    // Predicated region
    $region26: #{tpu_custom_call.1} parent=1 // pred_check
      _
    $region27: #{tpu_custom_call.1} parent=1 // pred_check_branch
      %1757 = sbr.rel (0) target = $region29
    $region28: #{tpu_custom_call.1} parent=1 // pred_region
      _
    $region29: #{tpu_custom_call.1} parent=1 // pred_fallthru
      _
    // Predicated region
    $region30: #{tpu_custom_call.1} parent=1 // pred_check
      _
    $region31: #{tpu_custom_call.1} parent=1 // pred_check_branch
      %1759 = sbr.rel (0) target = $region33
    $region32: #{tpu_custom_call.1} parent=1 // pred_region
      _
    $region33: #{tpu_custom_call.1} parent=1 // pred_fallthru
      _
    %1760 = vsyncpa [#allocation3], 1
    %1761 = vsyncpa [#allocation5], 1

</llo_original>
